<compile_context>
chip_gen: v7x
topology: tpu7x:2x2x1
jax: 0.10.0
libtpu: 0.0.40
codegen_flags: <defaults>
</compile_context>

<pallas_src>
import jax
import jax.numpy as jnp
from jax.experimental import pallas as pl
from jax.experimental.pallas import tpu as pltpu

_LANE = 128       # lane width: pad every feature axis to a multiple of this
_SUBLANE = 8      # f32 sublane granularity for the batch (row) axis
_MAX_TB = 1024    # batch tile rows; 1024*128*4B = 512 KiB/buffer -> safe on v5e


def _round_up(x, m):
    return ((x + m - 1) // m) * m


def _pad2d(x, rows, cols):
    r, c = x.shape
    if r == rows and c == cols:
        return x
    return jnp.pad(x, ((0, rows - r), (0, cols - c)))


def _actor_kernel(bound_ref, s_ref, w1_ref, w2_ref, w3_ref, o_ref):
    """One batch tile of the 3-layer tanh MLP. All operands lane-aligned."""
    bound = bound_ref[0, 0]                      # runtime scalar from SMEM
    hp = jax.lax.Precision.HIGHEST               # f32 parity with torch Linear
    x = s_ref[...]
    h1 = jnp.tanh(jnp.dot(x, w1_ref[...],
                          preferred_element_type=jnp.float32, precision=hp))
    h2 = jnp.tanh(jnp.dot(h1, w2_ref[...],
                          preferred_element_type=jnp.float32, precision=hp))
    d = jnp.dot(h2, w3_ref[...],
                preferred_element_type=jnp.float32, precision=hp)
    # Lane-dense (TB, 128) store; valid columns are sliced in the wrapper.
    o_ref[...] = (jnp.tanh(d) * bound).astype(o_ref.dtype)


def actor_forward(state, w1, w2, w3, control_action_upper_bound):
    """Runs the Actor MLP forward pass with a Pallas TPU kernel.

    state: (num_states,) or (B, num_states) float32
    w1: (num_states, hidden), w2: (hidden, hidden), w3: (hidden, num_actions)
    """
    was_1d = state.ndim == 1
    if was_1d:
        state = state[None, :]                   # (1, num_states)

    B, num_states = state.shape
    hidden = w1.shape[1]
    num_actions = w3.shape[1]

    # Lane-align every feature / contraction axis.
    K1 = _round_up(num_states, _LANE)
    K2 = _round_up(hidden, _LANE)
    N = _round_up(num_actions, _LANE)

    # Batch tiling: TB is a multiple of 8 sublanes, capped so double-buffered
    # state+out tiles stay small relative to scoped VMEM on all chips.
    TB = min(_MAX_TB, _round_up(B, _SUBLANE))
    B_pad = _round_up(B, TB)
    grid = (B_pad // TB,)

    state_p = _pad2d(state.astype(jnp.float32), B_pad, K1)
    w1_p = _pad2d(w1.astype(jnp.float32), K1, K2)
    w2_p = _pad2d(w2.astype(jnp.float32), K2, K2)
    w3_p = _pad2d(w3.astype(jnp.float32), K2, N)
    bound_arr = jnp.full((1, 1), control_action_upper_bound, dtype=jnp.float32)

    flops = 2 * B_pad * (K1 * K2 + K2 * K2 + K2 * N)
    transcendentals = B_pad * (K2 + K2 + N)
    bytes_accessed = 4 * (state_p.size + w1_p.size + w2_p.size + w3_p.size
                          + B_pad * N)

    out_padded = pl.pallas_call(
        _actor_kernel,
        out_shape=jax.ShapeDtypeStruct((B_pad, N), jnp.float32),
        grid=grid,
        in_specs=[
            # Runtime scalar bound in SMEM (no recompile when it changes).
            pl.BlockSpec((1, 1), lambda i: (0, 0),
                         memory_space=pltpu.MemorySpace.SMEM),
            # State: tiled over the batch axis.
            pl.BlockSpec((TB, K1), lambda i: (i, 0)),
            # Weights: constant index_map -> stay resident in VMEM.
            pl.BlockSpec((K1, K2), lambda i: (0, 0)),
            pl.BlockSpec((K2, K2), lambda i: (0, 0)),
            pl.BlockSpec((K2, N), lambda i: (0, 0)),
        ],
        out_specs=pl.BlockSpec((TB, N), lambda i: (i, 0)),
        compiler_params=pltpu.CompilerParams(
            dimension_semantics=("parallel",),   # shards across TCs on v7x
        ),
        cost_estimate=pl.CostEstimate(
            flops=flops,
            transcendentals=transcendentals,
            bytes_accessed=bytes_accessed,
        ),
    )(bound_arr, state_p, w1_p, w2_p, w3_p)

    # Strip batch and lane padding outside the kernel.
    out = out_padded[:B, :num_actions]

    if was_1d:
        out = out[0]                             # torch Linear on 1-D -> 1-D
    # torch's .squeeze(0): only drops the leading axis if its size is 1.
    if out.ndim >= 1 and out.shape[0] == 1:
        out = jnp.squeeze(out, axis=0)
    return out


def init_actor_params(key, num_states, num_actions, hidden_dim=16):
    """Deterministic init matching nn.init.uniform_(w, -0.01, 0.01).

    Weights are stored as (in_features, out_features) — transposed relative to
    torch's (out, in) — so the kernel can compute x @ W directly.
    """
    k1, k2, k3 = jax.random.split(key, 3)
    w1 = jax.random.uniform(k1, (num_states, hidden_dim), jnp.float32, -0.01, 0.01)
    w2 = jax.random.uniform(k2, (hidden_dim, hidden_dim), jnp.float32, -0.01, 0.01)
    w3 = jax.random.uniform(k3, (hidden_dim, num_actions), jnp.float32, -0.01, 0.01)
    return w1, w2, w3


def _reference(state_2d, w1, w2, w3, bound):
    hp = jax.lax.Precision.HIGHEST
    h1 = jnp.tanh(jnp.dot(state_2d, w1, precision=hp))
    h2 = jnp.tanh(jnp.dot(h1, w2, precision=hp))
    d = jnp.dot(h2, w3, precision=hp)
    return jnp.tanh(d) * bound


if __name__ == "__main__":
    num_states = 8
    num_actions = 4
    hidden_dim = 16
    control_action_upper_bound = 2.0
    batch = 2

    key = jax.random.PRNGKey(0)
    k_params, k_state, k_big = jax.random.split(key, 3)

    w1, w2, w3 = init_actor_params(k_params, num_states, num_actions, hidden_dim)

    # 2-D (batched) state
    state_2d = jax.random.normal(k_state, (batch, num_states), jnp.float32)
    action_2d = actor_forward(state_2d, w1, w2, w3, control_action_upper_bound)
    jax.block_until_ready(action_2d)
    assert action_2d.shape == (batch, num_actions)
    ref_2d = _reference(state_2d, w1, w2, w3, control_action_upper_bound)
    assert jnp.allclose(action_2d, ref_2d, atol=1e-6, rtol=1e-6)

    # 1-D state path (squeeze semantics of the torch module)
    state_1d = state_2d[0]
    action_1d = actor_forward(state_1d, w1, w2, w3, control_action_upper_bound)
    jax.block_until_ready(action_1d)
    assert action_1d.shape == (num_actions,)
    assert jnp.allclose(action_1d, ref_2d[0], atol=1e-6, rtol=1e-6)

    # Larger batch exercises the tiled grid (TB=1024, grid=(3,)) + row padding.
    big_b = 2500
    state_big = jax.random.normal(k_big, (big_b, num_states), jnp.float32)
    action_big = actor_forward(state_big, w1, w2, w3, control_action_upper_bound)
    jax.block_until_ready(action_big)
    assert action_big.shape == (big_b, num_actions)
    ref_big = _reference(state_big, w1, w2, w3, control_action_upper_bound)
    assert jnp.allclose(action_big, ref_big, atol=1e-5, rtol=1e-5)

    print("KERNEL_OK")
</pallas_src>

<mosaic_0001>
module attributes {stable_mosaic.version = 11 : i64} {
  func.func @_actor_kernel(%arg0: i32, %arg1: memref<1x1xf32, #tpu.memory_space<smem>>, %arg2: memref<8x128xf32, #tpu.memory_space<vmem>>, %arg3: memref<128x128xf32, #tpu.memory_space<vmem>>, %arg4: memref<128x128xf32, #tpu.memory_space<vmem>>, %arg5: memref<128x128xf32, #tpu.memory_space<vmem>>, %arg6: memref<8x128xf32, #tpu.memory_space<vmem>>) attributes {dimension_semantics = [#tpu.dimension_semantics<parallel>], iteration_bounds = array<i64: 1>, scalar_prefetch = 0 : i64, scratch_operands = 0 : i64, tpu.core_type = #tpu.core_type<tc>, window_params = [{transform_indices = @transform_0, window_bounds = array<i64: 1, 1>}, {transform_indices = @transform_1, window_bounds = array<i64: 8, 128>}, {pipeline_mode = #tpu.pipeline_mode<synchronous>, transform_indices = @transform_2, window_bounds = array<i64: 128, 128>}, {pipeline_mode = #tpu.pipeline_mode<synchronous>, transform_indices = @transform_3, window_bounds = array<i64: 128, 128>}, {pipeline_mode = #tpu.pipeline_mode<synchronous>, transform_indices = @transform_4, window_bounds = array<i64: 128, 128>}, {transform_indices = @transform_5, window_bounds = array<i64: 8, 128>}]} {
    %c0 = arith.constant 0 : index
    %c0_0 = arith.constant 0 : index
    %0 = memref.load %arg1[%c0, %c0_0] : memref<1x1xf32, #tpu.memory_space<smem>>
    %c0_1 = arith.constant 0 : index
    %c0_2 = arith.constant 0 : index
    %1 = vector.load %arg2[%c0_1, %c0_2] : memref<8x128xf32, #tpu.memory_space<vmem>>, vector<8x128xf32>
    %c0_3 = arith.constant 0 : index
    %c0_4 = arith.constant 0 : index
    %2 = vector.load %arg3[%c0_3, %c0_4] : memref<128x128xf32, #tpu.memory_space<vmem>>, vector<128x128xf32>
    %cst = arith.constant dense<0.000000e+00> : vector<8x128xf32>
    %3 = tpu.matmul %1, %2, %cst {dimension_numbers = #tpu.dot_dimension_numbers<[1], [0], [0], [1], [0, 0, 1, 1], [], []>, precision = #tpu.contract_precision<fp32>} : vector<8x128xf32>, vector<128x128xf32>, vector<8x128xf32> -> vector<8x128xf32>
    %4 = math.tanh %3 : vector<8x128xf32>
    %c0_5 = arith.constant 0 : index
    %c0_6 = arith.constant 0 : index
    %5 = vector.load %arg4[%c0_5, %c0_6] : memref<128x128xf32, #tpu.memory_space<vmem>>, vector<128x128xf32>
    %cst_7 = arith.constant dense<0.000000e+00> : vector<8x128xf32>
    %6 = tpu.matmul %4, %5, %cst_7 {dimension_numbers = #tpu.dot_dimension_numbers<[1], [0], [0], [1], [0, 0, 1, 1], [], []>, precision = #tpu.contract_precision<fp32>} : vector<8x128xf32>, vector<128x128xf32>, vector<8x128xf32> -> vector<8x128xf32>
    %7 = math.tanh %6 : vector<8x128xf32>
    %c0_8 = arith.constant 0 : index
    %c0_9 = arith.constant 0 : index
    %8 = vector.load %arg5[%c0_8, %c0_9] : memref<128x128xf32, #tpu.memory_space<vmem>>, vector<128x128xf32>
    %cst_10 = arith.constant dense<0.000000e+00> : vector<8x128xf32>
    %9 = tpu.matmul %7, %8, %cst_10 {dimension_numbers = #tpu.dot_dimension_numbers<[1], [0], [0], [1], [0, 0, 1, 1], [], []>, precision = #tpu.contract_precision<fp32>} : vector<8x128xf32>, vector<128x128xf32>, vector<8x128xf32> -> vector<8x128xf32>
    %10 = math.tanh %9 : vector<8x128xf32>
    %11 = vector.broadcast %0 : f32 to vector<8x128xf32>
    %12 = arith.mulf %10, %11 : vector<8x128xf32>
    %c0_11 = arith.constant 0 : index
    %c0_12 = arith.constant 0 : index
    %13 = vector.load %arg6[%c0_11, %c0_12] : memref<8x128xf32, #tpu.memory_space<vmem>>, vector<8x128xf32>
    tpu.vector_store %arg6[%c0_11, %c0_12], %12 {strides = array<i32>} : memref<8x128xf32, #tpu.memory_space<vmem>>, vector<8x128xf32>,
    return
  }
  func.func @transform_0(%arg0: i32) -> (i32, i32) {
    %c0_i32 = arith.constant 0 : i32
    %c0_i32_0 = arith.constant 0 : i32
    %c0_i32_1 = arith.constant 0 : i32
    return %c0_i32, %c0_i32_0 : i32, i32
  }
  func.func @transform_1(%arg0: i32) -> (i32, i32) {
    %c0_i32 = arith.constant 0 : i32
    %c0_i32_0 = arith.constant 0 : i32
    return %arg0, %c0_i32 : i32, i32
  }
  func.func @transform_2(%arg0: i32) -> (i32, i32) {
    %c0_i32 = arith.constant 0 : i32
    %c0_i32_0 = arith.constant 0 : i32
    %c0_i32_1 = arith.constant 0 : i32
    return %c0_i32, %c0_i32_0 : i32, i32
  }
  func.func @transform_3(%arg0: i32) -> (i32, i32) {
    %c0_i32 = arith.constant 0 : i32
    %c0_i32_0 = arith.constant 0 : i32
    %c0_i32_1 = arith.constant 0 : i32
    return %c0_i32, %c0_i32_0 : i32, i32
  }
  func.func @transform_4(%arg0: i32) -> (i32, i32) {
    %c0_i32 = arith.constant 0 : i32
    %c0_i32_0 = arith.constant 0 : i32
    %c0_i32_1 = arith.constant 0 : i32
    return %c0_i32, %c0_i32_0 : i32, i32
  }
  func.func @transform_5(%arg0: i32) -> (i32, i32) {
    %c0_i32 = arith.constant 0 : i32
    %c0_i32_0 = arith.constant 0 : i32
    return %arg0, %c0_i32 : i32, i32
  }
}

</mosaic_0001>

<llo_original>
// kernel: tpu_custom_call.1
$region0: #{tpu_custom_call.1}
  #allocation0 [shape = 'u32[]', space=smem, size = 0x4, offset = 0x4, fixed_abs, tag = 'smem constant byte address 0x4 - core index']
  #allocation1 [shape = 'u32[144,128]{1,0:T(1,128)}', space=vmem, size = 0x12000, scoped, tag = 'internal scratch']
  #allocation2 [shape = 'f32[1,1]{1,0:T(1,128)S(6)}', space=smem, size = 0x200, scoped, tag = 'scoped memory for tpu_custom_call.1']
  %s0 = inlined_call_operand.<no memory space> [shape: f32[1,1], index: 0, kind: input, shape index: {}]
  %s1 = inlined_call_operand.hbm [shape: f32[8,128], index: 1, kind: input, shape index: {}]
  %s2 = inlined_call_operand.hbm [shape: f32[128,128], index: 2, kind: input, shape index: {}]
  %s3 = inlined_call_operand.hbm [shape: f32[128,128], index: 3, kind: input, shape index: {}]
  %s4 = inlined_call_operand.hbm [shape: f32[128,128], index: 4, kind: input, shape index: {}]
  %s5 = inlined_call_operand.hbm [shape: f32[8,128], index: 5, kind: output, shape index: {}]
  %s6 = sld [smem:[#allocation0]]
  $region46: #{tpu_custom_call.1} parent=0
    _
  %s8 = ssub.s32 1, %s6
  %s9 = scalar_select 0, %s8, %s6
  %10 = sst [smem:[#allocation2]] %s0
  $region1: #{tpu_custom_call.1} parent=0
    #allocation3 [shape = 'u8[4096]{0}', space=vmem, size = 0x1000, scoped, tag = 'input window, operand 1, single buffered']
    #allocation4 [shape = 's32[1]{0}', space=sflag, size = 0x4, scoped, tag = 'scoped memory for tpu_custom_call.1']
    #allocation5 [shape = 's32[1]{0}', space=sflag, size = 0x4, scoped, tag = 'scoped memory for tpu_custom_call.1']
    #allocation6 [shape = 'u8[65536]{0}', space=vmem, size = 0x10000, scoped, tag = 'input window, operand 2, single buffered']
    #allocation7 [shape = 's32[1]{0}', space=sflag, size = 0x4, scoped, tag = 'scoped memory for tpu_custom_call.1']
    #allocation8 [shape = 'u8[65536]{0}', space=vmem, size = 0x10000, scoped, tag = 'input window, operand 3, single buffered']
    #allocation9 [shape = 'u8[65536]{0}', space=vmem, size = 0x10000, scoped, tag = 'input window, operand 4, single buffered']
    #allocation10 [shape = 's32[1]{0}', space=sflag, size = 0x4, scoped, tag = 'scoped memory for tpu_custom_call.1']
    #allocation11 [shape = 'u8[4096]{0}', space=vmem, size = 0x1000, scoped, tag = 'output window, operand 0, single buffered']
    %11 = vsyncpa [#allocation4], 0
    %12 = vsyncpa [#allocation7], 0
    %13 = vsyncpa [#allocation10], 0
    %14 = vsyncpa [#allocation5], 0
    // Predicated region
    $region2: #{tpu_custom_call.1} parent=1 // pred_check
      _
    $region3: #{tpu_custom_call.1} parent=1 // pred_check_branch
      %16 = sbr.rel (0) target = $region5
    $region4: #{tpu_custom_call.1} parent=1 // pred_region
      _
    $region5: #{tpu_custom_call.1} parent=1 // pred_fallthru
      _
    // Predicated region
    $region6: #{tpu_custom_call.1} parent=1 // pred_check
      _
    $region7: #{tpu_custom_call.1} parent=1 // pred_check_branch
      %18 = sbr.rel (0) target = $region9
    $region8: #{tpu_custom_call.1} parent=1 // pred_region
      %s20 = ssub.s32 128, 128
      %21 = vsyncadd [#allocation4], %s20
      %s23 = sshll.u32 [#allocation3], 4
      %s24 = int_to_ptr.vmem [resolvable:$true] %s23
      %26 = dma.hbm_to_vmem [thread:$0]  %s1, 128, %s24, [#allocation4]
    $region9: #{tpu_custom_call.1} parent=1 // pred_fallthru
      _
    // Predicated region
    $region10: #{tpu_custom_call.1} parent=1 // pred_check
      _
    $region11: #{tpu_custom_call.1} parent=1 // pred_check_branch
      %28 = sbr.rel (0) target = $region13
    $region12: #{tpu_custom_call.1} parent=1 // pred_region
      %s30 = ssub.s32 2048, 2048
      %31 = vsyncadd [#allocation7], %s30
      %s32 = sshll.u32 [#allocation6], 4
      %s33 = int_to_ptr.vmem [resolvable:$true] %s32
      %38 = dma.hbm_to_vmem [thread:$0]  %s2, 2048, %s33, [#allocation7], 128, 128, 8
    $region13: #{tpu_custom_call.1} parent=1 // pred_fallthru
      _
    // Predicated region
    $region14: #{tpu_custom_call.1} parent=1 // pred_check
      _
    $region15: #{tpu_custom_call.1} parent=1 // pred_check_branch
      %40 = sbr.rel (0) target = $region17
    $region16: #{tpu_custom_call.1} parent=1 // pred_region
      %s42 = ssub.s32 2048, 2048
      %43 = vsyncadd [#allocation7], %s42
      %s44 = sshll.u32 [#allocation8], 4
      %s45 = int_to_ptr.vmem [resolvable:$true] %s44
      %50 = dma.hbm_to_vmem [thread:$0]  %s3, 2048, %s45, [#allocation7], 128, 128, 8
    $region17: #{tpu_custom_call.1} parent=1 // pred_fallthru
      _
    // Predicated region
    $region18: #{tpu_custom_call.1} parent=1 // pred_check
      _
    $region19: #{tpu_custom_call.1} parent=1 // pred_check_branch
      %52 = sbr.rel (0) target = $region21
    $region20: #{tpu_custom_call.1} parent=1 // pred_region
      %s54 = ssub.s32 2048, 2048
      %55 = vsyncadd [#allocation10], %s54
      %s56 = sshll.u32 [#allocation9], 4
      %s57 = int_to_ptr.vmem [resolvable:$true] %s56
      %62 = dma.hbm_to_vmem [thread:$0]  %s4, 2048, %s57, [#allocation10], 128, 128, 8
    $region21: #{tpu_custom_call.1} parent=1 // pred_fallthru
      _
    // Predicated region
    $region22: #{tpu_custom_call.1} parent=1 // pred_check
      _
    $region23: #{tpu_custom_call.1} parent=1 // pred_check_branch
      %64 = sbr.rel (0) target = $region25
    $region24: #{tpu_custom_call.1} parent=1 // pred_region
      %65 = dma.done [#allocation4], 128
    $region25: #{tpu_custom_call.1} parent=1 // pred_fallthru
      _
    // Predicated region
    $region26: #{tpu_custom_call.1} parent=1 // pred_check
      _
    $region27: #{tpu_custom_call.1} parent=1 // pred_check_branch
      %67 = sbr.rel (0) target = $region29
    $region28: #{tpu_custom_call.1} parent=1 // pred_region
      %68 = dma.done [#allocation7], 2048
    $region29: #{tpu_custom_call.1} parent=1 // pred_fallthru
      _
    // Predicated region
    $region30: #{tpu_custom_call.1} parent=1 // pred_check
      _
    $region31: #{tpu_custom_call.1} parent=1 // pred_check_branch
      %70 = sbr.rel (0) target = $region33
    $region32: #{tpu_custom_call.1} parent=1 // pred_region
      %71 = dma.done [#allocation7], 2048
    $region33: #{tpu_custom_call.1} parent=1 // pred_fallthru
      _
    // Predicated region
    $region34: #{tpu_custom_call.1} parent=1 // pred_check
      _
    $region35: #{tpu_custom_call.1} parent=1 // pred_check_branch
      %73 = sbr.rel (0) target = $region37
    $region36: #{tpu_custom_call.1} parent=1 // pred_region
      %74 = dma.done [#allocation10], 2048
    $region37: #{tpu_custom_call.1} parent=1 // pred_fallthru
      _
    %s75 = sld [smem:[#allocation2]]
    %v76 = vld [vmem:[#allocation3] sm:$0xff]
    %v77 = vld [vmem:[#allocation6] sm:$0xff]
    %v78 = vld [vmem:[#allocation6 + $0x8] sm:$0xff]
    %v79 = vld [vmem:[#allocation6 + $0x10] sm:$0xff]
    %v80 = vld [vmem:[#allocation6 + $0x18] sm:$0xff]
    %v81 = vld [vmem:[#allocation6 + $0x20] sm:$0xff]
    %v82 = vld [vmem:[#allocation6 + $0x28] sm:$0xff]
    %v83 = vld [vmem:[#allocation6 + $0x30] sm:$0xff]
    %v84 = vld [vmem:[#allocation6 + $0x38] sm:$0xff]
    %v85 = vld [vmem:[#allocation6 + $0x40] sm:$0xff]
    %v86 = vld [vmem:[#allocation6 + $0x48] sm:$0xff]
    %v87 = vld [vmem:[#allocation6 + $0x50] sm:$0xff]
    %v88 = vld [vmem:[#allocation6 + $0x58] sm:$0xff]
    %v89 = vld [vmem:[#allocation6 + $0x60] sm:$0xff]
    %v90 = vld [vmem:[#allocation6 + $0x68] sm:$0xff]
    %v91 = vld [vmem:[#allocation6 + $0x70] sm:$0xff]
    %v92 = vld [vmem:[#allocation6 + $0x78] sm:$0xff]
    %93 = vmatprep.subr.mxu0 0.0
    %v94 = vand.u32 %v77, 4294901760
    %95 = vmatpush1.msra.mxu0 %v94
    %96 = vmatprep.subr.mxu0 0.0
    %v97 = vand.u32 %v78, 4294901760
    %98 = vmatpush1.msra.mxu0 %v97
    %99 = vmatprep.subr.mxu0 0.0
    %v100 = vand.u32 %v79, 4294901760
    %101 = vmatpush1.msra.mxu0 %v100
    %102 = vmatprep.subr.mxu0 0.0
    %v103 = vand.u32 %v80, 4294901760
    %104 = vmatpush1.msra.mxu0 %v103
    %105 = vmatprep.subr.mxu0 0.0
    %v106 = vand.u32 %v81, 4294901760
    %107 = vmatpush1.msra.mxu0 %v106
    %108 = vmatprep.subr.mxu0 0.0
    %v109 = vand.u32 %v82, 4294901760
    %110 = vmatpush1.msra.mxu0 %v109
    %111 = vmatprep.subr.mxu0 0.0
    %v112 = vand.u32 %v83, 4294901760
    %113 = vmatpush1.msra.mxu0 %v112
    %114 = vmatprep.subr.mxu0 0.0
    %v115 = vand.u32 %v84, 4294901760
    %116 = vmatpush1.msra.mxu0 %v115
    %117 = vmatprep.subr.mxu0 0.0
    %v118 = vand.u32 %v85, 4294901760
    %119 = vmatpush1.msra.mxu0 %v118
    %120 = vmatprep.subr.mxu0 0.0
    %v121 = vand.u32 %v86, 4294901760
    %122 = vmatpush1.msra.mxu0 %v121
    %123 = vmatprep.subr.mxu0 0.0
    %v124 = vand.u32 %v87, 4294901760
    %125 = vmatpush1.msra.mxu0 %v124
    %126 = vmatprep.subr.mxu0 0.0
    %v127 = vand.u32 %v88, 4294901760
    %128 = vmatpush1.msra.mxu0 %v127
    %129 = vmatprep.subr.mxu0 0.0
    %v130 = vand.u32 %v89, 4294901760
    %131 = vmatpush1.msra.mxu0 %v130
    %132 = vmatprep.subr.mxu0 0.0
    %v133 = vand.u32 %v90, 4294901760
    %134 = vmatpush1.msra.mxu0 %v133
    %135 = vmatprep.subr.mxu0 0.0
    %v136 = vand.u32 %v91, 4294901760
    %137 = vmatpush1.msra.mxu0 %v136
    %138 = vmatprep.subr.mxu0 0.0
    %v139 = vand.u32 %v92, 4294901760
    %140 = vmatpush1.msra.mxu0 %v139
    %141 = vmatprep.subr.mxu0 0.0
    %142 = vmatpush1.msra.mxu0 0.0
    %143 = vmatprep.subr.mxu0 0.0
    %144 = vmatpush1.msra.mxu0 0.0
    %145 = vmatprep.subr.mxu0 0.0
    %146 = vmatpush1.msra.mxu0 0.0
    %147 = vmatprep.subr.mxu0 0.0
    %148 = vmatpush1.msra.mxu0 0.0
    %149 = vmatprep.subr.mxu0 0.0
    %150 = vmatpush1.msra.mxu0 0.0
    %151 = vmatprep.subr.mxu0 0.0
    %152 = vmatpush1.msra.mxu0 0.0
    %153 = vmatprep.subr.mxu0 0.0
    %154 = vmatpush1.msra.mxu0 0.0
    %155 = vmatprep.subr.mxu0 0.0
    %156 = vmatpush1.msra.mxu0 0.0
    %157 = vmatprep.subr.mxu0 0.0
    %158 = vmatpush1.msra.mxu0 0.0
    %159 = vmatprep.subr.mxu0 0.0
    %160 = vmatpush1.msra.mxu0 0.0
    %161 = vmatprep.subr.mxu0 0.0
    %162 = vmatpush1.msra.mxu0 0.0
    %163 = vmatprep.subr.mxu0 0.0
    %164 = vmatpush1.msra.mxu0 0.0
    %165 = vmatprep.subr.mxu0 0.0
    %166 = vmatpush1.msra.mxu0 0.0
    %167 = vmatprep.subr.mxu0 0.0
    %168 = vmatpush1.msra.mxu0 0.0
    %169 = vmatprep.subr.mxu0 0.0
    %170 = vmatpush1.msra.mxu0 0.0
    %171 = vmatprep.subr.mxu0 0.0
    %172 = vmatpush1.msra.mxu0 0.0
    %173 = vmatprep.mubr.f32.mxu0 0.0
    %v174 = vand.u32 %v76, 4294901760
    %v175 = vsub.f32 %v76, %v174
    %v176 = vand.u32 %v175, 4294901760
    %v177 = vsub.f32 %v175, %v176
    %v178 = vand.u32 %v177, 4294901760
    %179 = vmatmul.mubr.f32.gmra.mrb[0].mxu0 %v178
    %v180 = vpop.f32.mrb[0].mxu0
    %v181 = vadd.f32 0.0, %v180
    %v182 = vpop.f32.mrb[0].mxu0
    %183 = vdwg.mxu0
    %184 = vmatprep.subr.mxu0 0.0
    %v185 = vand.u32 %v77, 4294901760
    %v186 = vsub.f32 %v77, %v185
    %v187 = vand.u32 %v186, 4294901760
    %v188 = vsub.f32 %v186, %v187
    %v189 = vand.u32 %v188, 4294901760
    %190 = vmatpush1.msra.mxu0 %v189
    %191 = vmatprep.subr.mxu0 0.0
    %v192 = vand.u32 %v78, 4294901760
    %v193 = vsub.f32 %v78, %v192
    %v194 = vand.u32 %v193, 4294901760
    %v195 = vsub.f32 %v193, %v194
    %v196 = vand.u32 %v195, 4294901760
    %197 = vmatpush1.msra.mxu0 %v196
    %198 = vmatprep.subr.mxu0 0.0
    %v199 = vand.u32 %v79, 4294901760
    %v200 = vsub.f32 %v79, %v199
    %v201 = vand.u32 %v200, 4294901760
    %v202 = vsub.f32 %v200, %v201
    %v203 = vand.u32 %v202, 4294901760
    %204 = vmatpush1.msra.mxu0 %v203
    %205 = vmatprep.subr.mxu0 0.0
    %v206 = vand.u32 %v80, 4294901760
    %v207 = vsub.f32 %v80, %v206
    %v208 = vand.u32 %v207, 4294901760
    %v209 = vsub.f32 %v207, %v208
    %v210 = vand.u32 %v209, 4294901760
    %211 = vmatpush1.msra.mxu0 %v210
    %212 = vmatprep.subr.mxu0 0.0
    %v213 = vand.u32 %v81, 4294901760
    %v214 = vsub.f32 %v81, %v213
    %v215 = vand.u32 %v214, 4294901760
    %v216 = vsub.f32 %v214, %v215
    %v217 = vand.u32 %v216, 4294901760
    %218 = vmatpush1.msra.mxu0 %v217
    %219 = vmatprep.subr.mxu0 0.0
    %v220 = vand.u32 %v82, 4294901760
    %v221 = vsub.f32 %v82, %v220
    %v222 = vand.u32 %v221, 4294901760
    %v223 = vsub.f32 %v221, %v222
    %v224 = vand.u32 %v223, 4294901760
    %225 = vmatpush1.msra.mxu0 %v224
    %226 = vmatprep.subr.mxu0 0.0
    %v227 = vand.u32 %v83, 4294901760
    %v228 = vsub.f32 %v83, %v227
    %v229 = vand.u32 %v228, 4294901760
    %v230 = vsub.f32 %v228, %v229
    %v231 = vand.u32 %v230, 4294901760
    %232 = vmatpush1.msra.mxu0 %v231
    %233 = vmatprep.subr.mxu0 0.0
    %v234 = vand.u32 %v84, 4294901760
    %v235 = vsub.f32 %v84, %v234
    %v236 = vand.u32 %v235, 4294901760
    %v237 = vsub.f32 %v235, %v236
    %v238 = vand.u32 %v237, 4294901760
    %239 = vmatpush1.msra.mxu0 %v238
    %240 = vmatprep.subr.mxu0 0.0
    %v241 = vand.u32 %v85, 4294901760
    %v242 = vsub.f32 %v85, %v241
    %v243 = vand.u32 %v242, 4294901760
    %v244 = vsub.f32 %v242, %v243
    %v245 = vand.u32 %v244, 4294901760
    %246 = vmatpush1.msra.mxu0 %v245
    %247 = vmatprep.subr.mxu0 0.0
    %v248 = vand.u32 %v86, 4294901760
    %v249 = vsub.f32 %v86, %v248
    %v250 = vand.u32 %v249, 4294901760
    %v251 = vsub.f32 %v249, %v250
    %v252 = vand.u32 %v251, 4294901760
    %253 = vmatpush1.msra.mxu0 %v252
    %254 = vmatprep.subr.mxu0 0.0
    %v255 = vand.u32 %v87, 4294901760
    %v256 = vsub.f32 %v87, %v255
    %v257 = vand.u32 %v256, 4294901760
    %v258 = vsub.f32 %v256, %v257
    %v259 = vand.u32 %v258, 4294901760
    %260 = vmatpush1.msra.mxu0 %v259
    %261 = vmatprep.subr.mxu0 0.0
    %v262 = vand.u32 %v88, 4294901760
    %v263 = vsub.f32 %v88, %v262
    %v264 = vand.u32 %v263, 4294901760
    %v265 = vsub.f32 %v263, %v264
    %v266 = vand.u32 %v265, 4294901760
    %267 = vmatpush1.msra.mxu0 %v266
    %268 = vmatprep.subr.mxu0 0.0
    %v269 = vand.u32 %v89, 4294901760
    %v270 = vsub.f32 %v89, %v269
    %v271 = vand.u32 %v270, 4294901760
    %v272 = vsub.f32 %v270, %v271
    %v273 = vand.u32 %v272, 4294901760
    %274 = vmatpush1.msra.mxu0 %v273
    %275 = vmatprep.subr.mxu0 0.0
    %v276 = vand.u32 %v90, 4294901760
    %v277 = vsub.f32 %v90, %v276
    %v278 = vand.u32 %v277, 4294901760
    %v279 = vsub.f32 %v277, %v278
    %v280 = vand.u32 %v279, 4294901760
    %281 = vmatpush1.msra.mxu0 %v280
    %282 = vmatprep.subr.mxu0 0.0
    %v283 = vand.u32 %v91, 4294901760
    %v284 = vsub.f32 %v91, %v283
    %v285 = vand.u32 %v284, 4294901760
    %v286 = vsub.f32 %v284, %v285
    %v287 = vand.u32 %v286, 4294901760
    %288 = vmatpush1.msra.mxu0 %v287
    %289 = vmatprep.subr.mxu0 0.0
    %v290 = vand.u32 %v92, 4294901760
    %v291 = vsub.f32 %v92, %v290
    %v292 = vand.u32 %v291, 4294901760
    %v293 = vsub.f32 %v291, %v292
    %v294 = vand.u32 %v293, 4294901760
    %295 = vmatpush1.msra.mxu0 %v294
    %296 = vmatprep.subr.mxu0 0.0
    %297 = vmatpush1.msra.mxu0 0.0
    %298 = vmatprep.subr.mxu0 0.0
    %299 = vmatpush1.msra.mxu0 0.0
    %300 = vmatprep.subr.mxu0 0.0
    %301 = vmatpush1.msra.mxu0 0.0
    %302 = vmatprep.subr.mxu0 0.0
    %303 = vmatpush1.msra.mxu0 0.0
    %304 = vmatprep.subr.mxu0 0.0
    %305 = vmatpush1.msra.mxu0 0.0
    %306 = vmatprep.subr.mxu0 0.0
    %307 = vmatpush1.msra.mxu0 0.0
    %308 = vmatprep.subr.mxu0 0.0
    %309 = vmatpush1.msra.mxu0 0.0
    %310 = vmatprep.subr.mxu0 0.0
    %311 = vmatpush1.msra.mxu0 0.0
    %312 = vmatprep.subr.mxu0 0.0
    %313 = vmatpush1.msra.mxu0 0.0
    %314 = vmatprep.subr.mxu0 0.0
    %315 = vmatpush1.msra.mxu0 0.0
    %316 = vmatprep.subr.mxu0 0.0
    %317 = vmatpush1.msra.mxu0 0.0
    %318 = vmatprep.subr.mxu0 0.0
    %319 = vmatpush1.msra.mxu0 0.0
    %320 = vmatprep.subr.mxu0 0.0
    %321 = vmatpush1.msra.mxu0 0.0
    %322 = vmatprep.subr.mxu0 0.0
    %323 = vmatpush1.msra.mxu0 0.0
    %324 = vmatprep.subr.mxu0 0.0
    %325 = vmatpush1.msra.mxu0 0.0
    %326 = vmatprep.subr.mxu0 0.0
    %327 = vmatpush1.msra.mxu0 0.0
    %328 = vmatprep.mubr.f32.mxu0 0.0
    %v329 = vand.u32 %v76, 4294901760
    %330 = vmatmul.mubr.f32.gmra.mrb[0].mxu0 %v329
    %v331 = vpop.f32.mrb[0].mxu0
    %v332 = vadd.f32 %v181, %v331
    %v333 = vpop.f32.mrb[0].mxu0
    %334 = vdwg.mxu0
    %335 = vmatprep.subr.mxu0 0.0
    %v336 = vand.u32 %v77, 4294901760
    %v337 = vsub.f32 %v77, %v336
    %338 = vmatpush1.msra.mxu0 %v337
    %339 = vmatprep.subr.mxu0 0.0
    %v340 = vand.u32 %v78, 4294901760
    %v341 = vsub.f32 %v78, %v340
    %342 = vmatpush1.msra.mxu0 %v341
    %343 = vmatprep.subr.mxu0 0.0
    %v344 = vand.u32 %v79, 4294901760
    %v345 = vsub.f32 %v79, %v344
    %346 = vmatpush1.msra.mxu0 %v345
    %347 = vmatprep.subr.mxu0 0.0
    %v348 = vand.u32 %v80, 4294901760
    %v349 = vsub.f32 %v80, %v348
    %350 = vmatpush1.msra.mxu0 %v349
    %351 = vmatprep.subr.mxu0 0.0
    %v352 = vand.u32 %v81, 4294901760
    %v353 = vsub.f32 %v81, %v352
    %354 = vmatpush1.msra.mxu0 %v353
    %355 = vmatprep.subr.mxu0 0.0
    %v356 = vand.u32 %v82, 4294901760
    %v357 = vsub.f32 %v82, %v356
    %358 = vmatpush1.msra.mxu0 %v357
    %359 = vmatprep.subr.mxu0 0.0
    %v360 = vand.u32 %v83, 4294901760
    %v361 = vsub.f32 %v83, %v360
    %362 = vmatpush1.msra.mxu0 %v361
    %363 = vmatprep.subr.mxu0 0.0
    %v364 = vand.u32 %v84, 4294901760
    %v365 = vsub.f32 %v84, %v364
    %366 = vmatpush1.msra.mxu0 %v365
    %367 = vmatprep.subr.mxu0 0.0
    %v368 = vand.u32 %v85, 4294901760
    %v369 = vsub.f32 %v85, %v368
    %370 = vmatpush1.msra.mxu0 %v369
    %371 = vmatprep.subr.mxu0 0.0
    %v372 = vand.u32 %v86, 4294901760
    %v373 = vsub.f32 %v86, %v372
    %374 = vmatpush1.msra.mxu0 %v373
    %375 = vmatprep.subr.mxu0 0.0
    %v376 = vand.u32 %v87, 4294901760
    %v377 = vsub.f32 %v87, %v376
    %378 = vmatpush1.msra.mxu0 %v377
    %379 = vmatprep.subr.mxu0 0.0
    %v380 = vand.u32 %v88, 4294901760
    %v381 = vsub.f32 %v88, %v380
    %382 = vmatpush1.msra.mxu0 %v381
    %383 = vmatprep.subr.mxu0 0.0
    %v384 = vand.u32 %v89, 4294901760
    %v385 = vsub.f32 %v89, %v384
    %386 = vmatpush1.msra.mxu0 %v385
    %387 = vmatprep.subr.mxu0 0.0
    %v388 = vand.u32 %v90, 4294901760
    %v389 = vsub.f32 %v90, %v388
    %390 = vmatpush1.msra.mxu0 %v389
    %391 = vmatprep.subr.mxu0 0.0
    %v392 = vand.u32 %v91, 4294901760
    %v393 = vsub.f32 %v91, %v392
    %394 = vmatpush1.msra.mxu0 %v393
    %395 = vmatprep.subr.mxu0 0.0
    %v396 = vand.u32 %v92, 4294901760
    %v397 = vsub.f32 %v92, %v396
    %398 = vmatpush1.msra.mxu0 %v397
    %399 = vmatprep.subr.mxu0 0.0
    %400 = vmatpush1.msra.mxu0 0.0
    %401 = vmatprep.subr.mxu0 0.0
    %402 = vmatpush1.msra.mxu0 0.0
    %403 = vmatprep.subr.mxu0 0.0
    %404 = vmatpush1.msra.mxu0 0.0
    %405 = vmatprep.subr.mxu0 0.0
    %406 = vmatpush1.msra.mxu0 0.0
    %407 = vmatprep.subr.mxu0 0.0
    %408 = vmatpush1.msra.mxu0 0.0
    %409 = vmatprep.subr.mxu0 0.0
    %410 = vmatpush1.msra.mxu0 0.0
    %411 = vmatprep.subr.mxu0 0.0
    %412 = vmatpush1.msra.mxu0 0.0
    %413 = vmatprep.subr.mxu0 0.0
    %414 = vmatpush1.msra.mxu0 0.0
    %415 = vmatprep.subr.mxu0 0.0
    %416 = vmatpush1.msra.mxu0 0.0
    %417 = vmatprep.subr.mxu0 0.0
    %418 = vmatpush1.msra.mxu0 0.0
    %419 = vmatprep.subr.mxu0 0.0
    %420 = vmatpush1.msra.mxu0 0.0
    %421 = vmatprep.subr.mxu0 0.0
    %422 = vmatpush1.msra.mxu0 0.0
    %423 = vmatprep.subr.mxu0 0.0
    %424 = vmatpush1.msra.mxu0 0.0
    %425 = vmatprep.subr.mxu0 0.0
    %426 = vmatpush1.msra.mxu0 0.0
    %427 = vmatprep.subr.mxu0 0.0
    %428 = vmatpush1.msra.mxu0 0.0
    %429 = vmatprep.subr.mxu0 0.0
    %430 = vmatpush1.msra.mxu0 0.0
    %431 = vmatprep.mubr.f32.mxu0 0.0
    %v432 = vand.u32 %v76, 4294901760
    %v433 = vsub.f32 %v76, %v432
    %434 = vmatmul.mubr.f32.gmra.mrb[0].mxu0 %v433
    %v435 = vpop.f32.mrb[0].mxu0
    %v436 = vadd.f32 %v332, %v435
    %v437 = vpop.f32.mrb[0].mxu0
    %438 = vdwg.mxu0
    %439 = vmatprep.subr.mxu0 0.0
    %v440 = vand.u32 %v77, 4294901760
    %441 = vmatpush1.msra.mxu0 %v440
    %442 = vmatprep.subr.mxu0 0.0
    %v443 = vand.u32 %v78, 4294901760
    %444 = vmatpush1.msra.mxu0 %v443
    %445 = vmatprep.subr.mxu0 0.0
    %v446 = vand.u32 %v79, 4294901760
    %447 = vmatpush1.msra.mxu0 %v446
    %448 = vmatprep.subr.mxu0 0.0
    %v449 = vand.u32 %v80, 4294901760
    %450 = vmatpush1.msra.mxu0 %v449
    %451 = vmatprep.subr.mxu0 0.0
    %v452 = vand.u32 %v81, 4294901760
    %453 = vmatpush1.msra.mxu0 %v452
    %454 = vmatprep.subr.mxu0 0.0
    %v455 = vand.u32 %v82, 4294901760
    %456 = vmatpush1.msra.mxu0 %v455
    %457 = vmatprep.subr.mxu0 0.0
    %v458 = vand.u32 %v83, 4294901760
    %459 = vmatpush1.msra.mxu0 %v458
    %460 = vmatprep.subr.mxu0 0.0
    %v461 = vand.u32 %v84, 4294901760
    %462 = vmatpush1.msra.mxu0 %v461
    %463 = vmatprep.subr.mxu0 0.0
    %v464 = vand.u32 %v85, 4294901760
    %465 = vmatpush1.msra.mxu0 %v464
    %466 = vmatprep.subr.mxu0 0.0
    %v467 = vand.u32 %v86, 4294901760
    %468 = vmatpush1.msra.mxu0 %v467
    %469 = vmatprep.subr.mxu0 0.0
    %v470 = vand.u32 %v87, 4294901760
    %471 = vmatpush1.msra.mxu0 %v470
    %472 = vmatprep.subr.mxu0 0.0
    %v473 = vand.u32 %v88, 4294901760
    %474 = vmatpush1.msra.mxu0 %v473
    %475 = vmatprep.subr.mxu0 0.0
    %v476 = vand.u32 %v89, 4294901760
    %477 = vmatpush1.msra.mxu0 %v476
    %478 = vmatprep.subr.mxu0 0.0
    %v479 = vand.u32 %v90, 4294901760
    %480 = vmatpush1.msra.mxu0 %v479
    %481 = vmatprep.subr.mxu0 0.0
    %v482 = vand.u32 %v91, 4294901760
    %483 = vmatpush1.msra.mxu0 %v482
    %484 = vmatprep.subr.mxu0 0.0
    %v485 = vand.u32 %v92, 4294901760
    %486 = vmatpush1.msra.mxu0 %v485
    %487 = vmatprep.subr.mxu0 0.0
    %488 = vmatpush1.msra.mxu0 0.0
    %489 = vmatprep.subr.mxu0 0.0
    %490 = vmatpush1.msra.mxu0 0.0
    %491 = vmatprep.subr.mxu0 0.0
    %492 = vmatpush1.msra.mxu0 0.0
    %493 = vmatprep.subr.mxu0 0.0
    %494 = vmatpush1.msra.mxu0 0.0
    %495 = vmatprep.subr.mxu0 0.0
    %496 = vmatpush1.msra.mxu0 0.0
    %497 = vmatprep.subr.mxu0 0.0
    %498 = vmatpush1.msra.mxu0 0.0
    %499 = vmatprep.subr.mxu0 0.0
    %500 = vmatpush1.msra.mxu0 0.0
    %501 = vmatprep.subr.mxu0 0.0
    %502 = vmatpush1.msra.mxu0 0.0
    %503 = vmatprep.subr.mxu0 0.0
    %504 = vmatpush1.msra.mxu0 0.0
    %505 = vmatprep.subr.mxu0 0.0
    %506 = vmatpush1.msra.mxu0 0.0
    %507 = vmatprep.subr.mxu0 0.0
    %508 = vmatpush1.msra.mxu0 0.0
    %509 = vmatprep.subr.mxu0 0.0
    %510 = vmatpush1.msra.mxu0 0.0
    %511 = vmatprep.subr.mxu0 0.0
    %512 = vmatpush1.msra.mxu0 0.0
    %513 = vmatprep.subr.mxu0 0.0
    %514 = vmatpush1.msra.mxu0 0.0
    %515 = vmatprep.subr.mxu0 0.0
    %516 = vmatpush1.msra.mxu0 0.0
    %517 = vmatprep.subr.mxu0 0.0
    %518 = vmatpush1.msra.mxu0 0.0
    %519 = vmatprep.mubr.f32.mxu0 0.0
    %v520 = vand.u32 %v76, 4294901760
    %v521 = vsub.f32 %v76, %v520
    %v522 = vand.u32 %v521, 4294901760
    %523 = vmatmul.mubr.f32.gmra.mrb[0].mxu0 %v522
    %v524 = vpop.f32.mrb[0].mxu0
    %v525 = vadd.f32 %v436, %v524
    %v526 = vpop.f32.mrb[0].mxu0
    %527 = vdwg.mxu0
    %528 = vmatprep.subr.mxu0 0.0
    %v529 = vand.u32 %v77, 4294901760
    %v530 = vsub.f32 %v77, %v529
    %v531 = vand.u32 %v530, 4294901760
    %532 = vmatpush1.msra.mxu0 %v531
    %533 = vmatprep.subr.mxu0 0.0
    %v534 = vand.u32 %v78, 4294901760
    %v535 = vsub.f32 %v78, %v534
    %v536 = vand.u32 %v535, 4294901760
    %537 = vmatpush1.msra.mxu0 %v536
    %538 = vmatprep.subr.mxu0 0.0
    %v539 = vand.u32 %v79, 4294901760
    %v540 = vsub.f32 %v79, %v539
    %v541 = vand.u32 %v540, 4294901760
    %542 = vmatpush1.msra.mxu0 %v541
    %543 = vmatprep.subr.mxu0 0.0
    %v544 = vand.u32 %v80, 4294901760
    %v545 = vsub.f32 %v80, %v544
    %v546 = vand.u32 %v545, 4294901760
    %547 = vmatpush1.msra.mxu0 %v546
    %548 = vmatprep.subr.mxu0 0.0
    %v549 = vand.u32 %v81, 4294901760
    %v550 = vsub.f32 %v81, %v549
    %v551 = vand.u32 %v550, 4294901760
    %552 = vmatpush1.msra.mxu0 %v551
    %553 = vmatprep.subr.mxu0 0.0
    %v554 = vand.u32 %v82, 4294901760
    %v555 = vsub.f32 %v82, %v554
    %v556 = vand.u32 %v555, 4294901760
    %557 = vmatpush1.msra.mxu0 %v556
    %558 = vmatprep.subr.mxu0 0.0
    %v559 = vand.u32 %v83, 4294901760
    %v560 = vsub.f32 %v83, %v559
    %v561 = vand.u32 %v560, 4294901760
    %562 = vmatpush1.msra.mxu0 %v561
    %563 = vmatprep.subr.mxu0 0.0
    %v564 = vand.u32 %v84, 4294901760
    %v565 = vsub.f32 %v84, %v564
    %v566 = vand.u32 %v565, 4294901760
    %567 = vmatpush1.msra.mxu0 %v566
    %568 = vmatprep.subr.mxu0 0.0
    %v569 = vand.u32 %v85, 4294901760
    %v570 = vsub.f32 %v85, %v569
    %v571 = vand.u32 %v570, 4294901760
    %572 = vmatpush1.msra.mxu0 %v571
    %573 = vmatprep.subr.mxu0 0.0
    %v574 = vand.u32 %v86, 4294901760
    %v575 = vsub.f32 %v86, %v574
    %v576 = vand.u32 %v575, 4294901760
    %577 = vmatpush1.msra.mxu0 %v576
    %578 = vmatprep.subr.mxu0 0.0
    %v579 = vand.u32 %v87, 4294901760
    %v580 = vsub.f32 %v87, %v579
    %v581 = vand.u32 %v580, 4294901760
    %582 = vmatpush1.msra.mxu0 %v581
    %583 = vmatprep.subr.mxu0 0.0
    %v584 = vand.u32 %v88, 4294901760
    %v585 = vsub.f32 %v88, %v584
    %v586 = vand.u32 %v585, 4294901760
    %587 = vmatpush1.msra.mxu0 %v586
    %588 = vmatprep.subr.mxu0 0.0
    %v589 = vand.u32 %v89, 4294901760
    %v590 = vsub.f32 %v89, %v589
    %v591 = vand.u32 %v590, 4294901760
    %592 = vmatpush1.msra.mxu0 %v591
    %593 = vmatprep.subr.mxu0 0.0
    %v594 = vand.u32 %v90, 4294901760
    %v595 = vsub.f32 %v90, %v594
    %v596 = vand.u32 %v595, 4294901760
    %597 = vmatpush1.msra.mxu0 %v596
    %598 = vmatprep.subr.mxu0 0.0
    %v599 = vand.u32 %v91, 4294901760
    %v600 = vsub.f32 %v91, %v599
    %v601 = vand.u32 %v600, 4294901760
    %602 = vmatpush1.msra.mxu0 %v601
    %603 = vmatprep.subr.mxu0 0.0
    %v604 = vand.u32 %v92, 4294901760
    %v605 = vsub.f32 %v92, %v604
    %v606 = vand.u32 %v605, 4294901760
    %607 = vmatpush1.msra.mxu0 %v606
    %608 = vmatprep.subr.mxu0 0.0
    %609 = vmatpush1.msra.mxu0 0.0
    %610 = vmatprep.subr.mxu0 0.0
    %611 = vmatpush1.msra.mxu0 0.0
    %612 = vmatprep.subr.mxu0 0.0
    %613 = vmatpush1.msra.mxu0 0.0
    %614 = vmatprep.subr.mxu0 0.0
    %615 = vmatpush1.msra.mxu0 0.0
    %616 = vmatprep.subr.mxu0 0.0
    %617 = vmatpush1.msra.mxu0 0.0
    %618 = vmatprep.subr.mxu0 0.0
    %619 = vmatpush1.msra.mxu0 0.0
    %620 = vmatprep.subr.mxu0 0.0
    %621 = vmatpush1.msra.mxu0 0.0
    %622 = vmatprep.subr.mxu0 0.0
    %623 = vmatpush1.msra.mxu0 0.0
    %624 = vmatprep.subr.mxu0 0.0
    %625 = vmatpush1.msra.mxu0 0.0
    %626 = vmatprep.subr.mxu0 0.0
    %627 = vmatpush1.msra.mxu0 0.0
    %628 = vmatprep.subr.mxu0 0.0
    %629 = vmatpush1.msra.mxu0 0.0
    %630 = vmatprep.subr.mxu0 0.0
    %631 = vmatpush1.msra.mxu0 0.0
    %632 = vmatprep.subr.mxu0 0.0
    %633 = vmatpush1.msra.mxu0 0.0
    %634 = vmatprep.subr.mxu0 0.0
    %635 = vmatpush1.msra.mxu0 0.0
    %636 = vmatprep.subr.mxu0 0.0
    %637 = vmatpush1.msra.mxu0 0.0
    %638 = vmatprep.subr.mxu0 0.0
    %639 = vmatpush1.msra.mxu0 0.0
    %640 = vmatprep.mubr.f32.mxu0 0.0
    %v641 = vand.u32 %v76, 4294901760
    %642 = vmatmul.mubr.f32.gmra.mrb[0].mxu0 %v641
    %v643 = vpop.f32.mrb[0].mxu0
    %v644 = vadd.f32 %v525, %v643
    %v645 = vpop.f32.mrb[0].mxu0
    %646 = vdwg.mxu0
    %647 = vmatprep.subr.mxu0 0.0
    %v648 = vand.u32 %v77, 4294901760
    %649 = vmatpush1.msra.mxu0 %v648
    %650 = vmatprep.subr.mxu0 0.0
    %v651 = vand.u32 %v78, 4294901760
    %652 = vmatpush1.msra.mxu0 %v651
    %653 = vmatprep.subr.mxu0 0.0
    %v654 = vand.u32 %v79, 4294901760
    %655 = vmatpush1.msra.mxu0 %v654
    %656 = vmatprep.subr.mxu0 0.0
    %v657 = vand.u32 %v80, 4294901760
    %658 = vmatpush1.msra.mxu0 %v657
    %659 = vmatprep.subr.mxu0 0.0
    %v660 = vand.u32 %v81, 4294901760
    %661 = vmatpush1.msra.mxu0 %v660
    %662 = vmatprep.subr.mxu0 0.0
    %v663 = vand.u32 %v82, 4294901760
    %664 = vmatpush1.msra.mxu0 %v663
    %665 = vmatprep.subr.mxu0 0.0
    %v666 = vand.u32 %v83, 4294901760
    %667 = vmatpush1.msra.mxu0 %v666
    %668 = vmatprep.subr.mxu0 0.0
    %v669 = vand.u32 %v84, 4294901760
    %670 = vmatpush1.msra.mxu0 %v669
    %671 = vmatprep.subr.mxu0 0.0
    %v672 = vand.u32 %v85, 4294901760
    %673 = vmatpush1.msra.mxu0 %v672
    %674 = vmatprep.subr.mxu0 0.0
    %v675 = vand.u32 %v86, 4294901760
    %676 = vmatpush1.msra.mxu0 %v675
    %677 = vmatprep.subr.mxu0 0.0
    %v678 = vand.u32 %v87, 4294901760
    %679 = vmatpush1.msra.mxu0 %v678
    %680 = vmatprep.subr.mxu0 0.0
    %v681 = vand.u32 %v88, 4294901760
    %682 = vmatpush1.msra.mxu0 %v681
    %683 = vmatprep.subr.mxu0 0.0
    %v684 = vand.u32 %v89, 4294901760
    %685 = vmatpush1.msra.mxu0 %v684
    %686 = vmatprep.subr.mxu0 0.0
    %v687 = vand.u32 %v90, 4294901760
    %688 = vmatpush1.msra.mxu0 %v687
    %689 = vmatprep.subr.mxu0 0.0
    %v690 = vand.u32 %v91, 4294901760
    %691 = vmatpush1.msra.mxu0 %v690
    %692 = vmatprep.subr.mxu0 0.0
    %v693 = vand.u32 %v92, 4294901760
    %694 = vmatpush1.msra.mxu0 %v693
    %695 = vmatprep.subr.mxu0 0.0
    %696 = vmatpush1.msra.mxu0 0.0
    %697 = vmatprep.subr.mxu0 0.0
    %698 = vmatpush1.msra.mxu0 0.0
    %699 = vmatprep.subr.mxu0 0.0
    %700 = vmatpush1.msra.mxu0 0.0
    %701 = vmatprep.subr.mxu0 0.0
    %702 = vmatpush1.msra.mxu0 0.0
    %703 = vmatprep.subr.mxu0 0.0
    %704 = vmatpush1.msra.mxu0 0.0
    %705 = vmatprep.subr.mxu0 0.0
    %706 = vmatpush1.msra.mxu0 0.0
    %707 = vmatprep.subr.mxu0 0.0
    %708 = vmatpush1.msra.mxu0 0.0
    %709 = vmatprep.subr.mxu0 0.0
    %710 = vmatpush1.msra.mxu0 0.0
    %711 = vmatprep.subr.mxu0 0.0
    %712 = vmatpush1.msra.mxu0 0.0
    %713 = vmatprep.subr.mxu0 0.0
    %714 = vmatpush1.msra.mxu0 0.0
    %715 = vmatprep.subr.mxu0 0.0
    %716 = vmatpush1.msra.mxu0 0.0
    %717 = vmatprep.subr.mxu0 0.0
    %718 = vmatpush1.msra.mxu0 0.0
    %719 = vmatprep.subr.mxu0 0.0
    %720 = vmatpush1.msra.mxu0 0.0
    %721 = vmatprep.subr.mxu0 0.0
    %722 = vmatpush1.msra.mxu0 0.0
    %723 = vmatprep.subr.mxu0 0.0
    %724 = vmatpush1.msra.mxu0 0.0
    %725 = vmatprep.subr.mxu0 0.0
    %726 = vmatpush1.msra.mxu0 0.0
    %727 = vmatprep.mubr.f32.mxu0 0.0
    %v728 = vand.u32 %v76, 4294901760
    %729 = vmatmul.mubr.f32.gmra.mrb[0].mxu0 %v728
    %v730 = vpop.f32.mrb[0].mxu0
    %v731 = vadd.f32 %v644, %v730
    %v732 = vpop.f32.mrb[0].mxu0
    %733 = vdwg.mxu0
    %v734 = vtanh.pop %v731
    %v735 = vld [vmem:[#allocation8] sm:$0xff]
    %v736 = vld [vmem:[#allocation8 + $0x8] sm:$0xff]
    %v737 = vld [vmem:[#allocation8 + $0x10] sm:$0xff]
    %v738 = vld [vmem:[#allocation8 + $0x18] sm:$0xff]
    %v739 = vld [vmem:[#allocation8 + $0x20] sm:$0xff]
    %v740 = vld [vmem:[#allocation8 + $0x28] sm:$0xff]
    %v741 = vld [vmem:[#allocation8 + $0x30] sm:$0xff]
    %v742 = vld [vmem:[#allocation8 + $0x38] sm:$0xff]
    %v743 = vld [vmem:[#allocation8 + $0x40] sm:$0xff]
    %v744 = vld [vmem:[#allocation8 + $0x48] sm:$0xff]
    %v745 = vld [vmem:[#allocation8 + $0x50] sm:$0xff]
    %v746 = vld [vmem:[#allocation8 + $0x58] sm:$0xff]
    %v747 = vld [vmem:[#allocation8 + $0x60] sm:$0xff]
    %v748 = vld [vmem:[#allocation8 + $0x68] sm:$0xff]
    %v749 = vld [vmem:[#allocation8 + $0x70] sm:$0xff]
    %v750 = vld [vmem:[#allocation8 + $0x78] sm:$0xff]
    %751 = vmatprep.subr.mxu0 0.0
    %v752 = vand.u32 %v735, 4294901760
    %753 = vmatpush1.msra.mxu0 %v752
    %754 = vmatprep.subr.mxu0 0.0
    %v755 = vand.u32 %v736, 4294901760
    %756 = vmatpush1.msra.mxu0 %v755
    %757 = vmatprep.subr.mxu0 0.0
    %v758 = vand.u32 %v737, 4294901760
    %759 = vmatpush1.msra.mxu0 %v758
    %760 = vmatprep.subr.mxu0 0.0
    %v761 = vand.u32 %v738, 4294901760
    %762 = vmatpush1.msra.mxu0 %v761
    %763 = vmatprep.subr.mxu0 0.0
    %v764 = vand.u32 %v739, 4294901760
    %765 = vmatpush1.msra.mxu0 %v764
    %766 = vmatprep.subr.mxu0 0.0
    %v767 = vand.u32 %v740, 4294901760
    %768 = vmatpush1.msra.mxu0 %v767
    %769 = vmatprep.subr.mxu0 0.0
    %v770 = vand.u32 %v741, 4294901760
    %771 = vmatpush1.msra.mxu0 %v770
    %772 = vmatprep.subr.mxu0 0.0
    %v773 = vand.u32 %v742, 4294901760
    %774 = vmatpush1.msra.mxu0 %v773
    %775 = vmatprep.subr.mxu0 0.0
    %v776 = vand.u32 %v743, 4294901760
    %777 = vmatpush1.msra.mxu0 %v776
    %778 = vmatprep.subr.mxu0 0.0
    %v779 = vand.u32 %v744, 4294901760
    %780 = vmatpush1.msra.mxu0 %v779
    %781 = vmatprep.subr.mxu0 0.0
    %v782 = vand.u32 %v745, 4294901760
    %783 = vmatpush1.msra.mxu0 %v782
    %784 = vmatprep.subr.mxu0 0.0
    %v785 = vand.u32 %v746, 4294901760
    %786 = vmatpush1.msra.mxu0 %v785
    %787 = vmatprep.subr.mxu0 0.0
    %v788 = vand.u32 %v747, 4294901760
    %789 = vmatpush1.msra.mxu0 %v788
    %790 = vmatprep.subr.mxu0 0.0
    %v791 = vand.u32 %v748, 4294901760
    %792 = vmatpush1.msra.mxu0 %v791
    %793 = vmatprep.subr.mxu0 0.0
    %v794 = vand.u32 %v749, 4294901760
    %795 = vmatpush1.msra.mxu0 %v794
    %796 = vmatprep.subr.mxu0 0.0
    %v797 = vand.u32 %v750, 4294901760
    %798 = vmatpush1.msra.mxu0 %v797
    %799 = vmatprep.subr.mxu0 0.0
    %800 = vmatpush1.msra.mxu0 0.0
    %801 = vmatprep.subr.mxu0 0.0
    %802 = vmatpush1.msra.mxu0 0.0
    %803 = vmatprep.subr.mxu0 0.0
    %804 = vmatpush1.msra.mxu0 0.0
    %805 = vmatprep.subr.mxu0 0.0
    %806 = vmatpush1.msra.mxu0 0.0
    %807 = vmatprep.subr.mxu0 0.0
    %808 = vmatpush1.msra.mxu0 0.0
    %809 = vmatprep.subr.mxu0 0.0
    %810 = vmatpush1.msra.mxu0 0.0
    %811 = vmatprep.subr.mxu0 0.0
    %812 = vmatpush1.msra.mxu0 0.0
    %813 = vmatprep.subr.mxu0 0.0
    %814 = vmatpush1.msra.mxu0 0.0
    %815 = vmatprep.subr.mxu0 0.0
    %816 = vmatpush1.msra.mxu0 0.0
    %817 = vmatprep.subr.mxu0 0.0
    %818 = vmatpush1.msra.mxu0 0.0
    %819 = vmatprep.subr.mxu0 0.0
    %820 = vmatpush1.msra.mxu0 0.0
    %821 = vmatprep.subr.mxu0 0.0
    %822 = vmatpush1.msra.mxu0 0.0
    %823 = vmatprep.subr.mxu0 0.0
    %824 = vmatpush1.msra.mxu0 0.0
    %825 = vmatprep.subr.mxu0 0.0
    %826 = vmatpush1.msra.mxu0 0.0
    %827 = vmatprep.subr.mxu0 0.0
    %828 = vmatpush1.msra.mxu0 0.0
    %829 = vmatprep.subr.mxu0 0.0
    %830 = vmatpush1.msra.mxu0 0.0
    %831 = vmatprep.mubr.f32.mxu0 0.0
    %v832 = vand.u32 %v734, 4294901760
    %v833 = vsub.f32 %v734, %v832
    %v834 = vand.u32 %v833, 4294901760
    %v835 = vsub.f32 %v833, %v834
    %v836 = vand.u32 %v835, 4294901760
    %837 = vmatmul.mubr.f32.gmra.mrb[0].mxu0 %v836
    %v838 = vpop.f32.mrb[0].mxu0
    %v839 = vadd.f32 0.0, %v838
    %v840 = vpop.f32.mrb[0].mxu0
    %841 = vdwg.mxu0
    %842 = vmatprep.subr.mxu0 0.0
    %v843 = vand.u32 %v735, 4294901760
    %v844 = vsub.f32 %v735, %v843
    %v845 = vand.u32 %v844, 4294901760
    %v846 = vsub.f32 %v844, %v845
    %v847 = vand.u32 %v846, 4294901760
    %848 = vmatpush1.msra.mxu0 %v847
    %849 = vmatprep.subr.mxu0 0.0
    %v850 = vand.u32 %v736, 4294901760
    %v851 = vsub.f32 %v736, %v850
    %v852 = vand.u32 %v851, 4294901760
    %v853 = vsub.f32 %v851, %v852
    %v854 = vand.u32 %v853, 4294901760
    %855 = vmatpush1.msra.mxu0 %v854
    %856 = vmatprep.subr.mxu0 0.0
    %v857 = vand.u32 %v737, 4294901760
    %v858 = vsub.f32 %v737, %v857
    %v859 = vand.u32 %v858, 4294901760
    %v860 = vsub.f32 %v858, %v859
    %v861 = vand.u32 %v860, 4294901760
    %862 = vmatpush1.msra.mxu0 %v861
    %863 = vmatprep.subr.mxu0 0.0
    %v864 = vand.u32 %v738, 4294901760
    %v865 = vsub.f32 %v738, %v864
    %v866 = vand.u32 %v865, 4294901760
    %v867 = vsub.f32 %v865, %v866
    %v868 = vand.u32 %v867, 4294901760
    %869 = vmatpush1.msra.mxu0 %v868
    %870 = vmatprep.subr.mxu0 0.0
    %v871 = vand.u32 %v739, 4294901760
    %v872 = vsub.f32 %v739, %v871
    %v873 = vand.u32 %v872, 4294901760
    %v874 = vsub.f32 %v872, %v873
    %v875 = vand.u32 %v874, 4294901760
    %876 = vmatpush1.msra.mxu0 %v875
    %877 = vmatprep.subr.mxu0 0.0
    %v878 = vand.u32 %v740, 4294901760
    %v879 = vsub.f32 %v740, %v878
    %v880 = vand.u32 %v879, 4294901760
    %v881 = vsub.f32 %v879, %v880
    %v882 = vand.u32 %v881, 4294901760
    %883 = vmatpush1.msra.mxu0 %v882
    %884 = vmatprep.subr.mxu0 0.0
    %v885 = vand.u32 %v741, 4294901760
    %v886 = vsub.f32 %v741, %v885
    %v887 = vand.u32 %v886, 4294901760
    %v888 = vsub.f32 %v886, %v887
    %v889 = vand.u32 %v888, 4294901760
    %890 = vmatpush1.msra.mxu0 %v889
    %891 = vmatprep.subr.mxu0 0.0
    %v892 = vand.u32 %v742, 4294901760
    %v893 = vsub.f32 %v742, %v892
    %v894 = vand.u32 %v893, 4294901760
    %v895 = vsub.f32 %v893, %v894
    %v896 = vand.u32 %v895, 4294901760
    %897 = vmatpush1.msra.mxu0 %v896
    %898 = vmatprep.subr.mxu0 0.0
    %v899 = vand.u32 %v743, 4294901760
    %v900 = vsub.f32 %v743, %v899
    %v901 = vand.u32 %v900, 4294901760
    %v902 = vsub.f32 %v900, %v901
    %v903 = vand.u32 %v902, 4294901760
    %904 = vmatpush1.msra.mxu0 %v903
    %905 = vmatprep.subr.mxu0 0.0
    %v906 = vand.u32 %v744, 4294901760
    %v907 = vsub.f32 %v744, %v906
    %v908 = vand.u32 %v907, 4294901760
    %v909 = vsub.f32 %v907, %v908
    %v910 = vand.u32 %v909, 4294901760
    %911 = vmatpush1.msra.mxu0 %v910
    %912 = vmatprep.subr.mxu0 0.0
    %v913 = vand.u32 %v745, 4294901760
    %v914 = vsub.f32 %v745, %v913
    %v915 = vand.u32 %v914, 4294901760
    %v916 = vsub.f32 %v914, %v915
    %v917 = vand.u32 %v916, 4294901760
    %918 = vmatpush1.msra.mxu0 %v917
    %919 = vmatprep.subr.mxu0 0.0
    %v920 = vand.u32 %v746, 4294901760
    %v921 = vsub.f32 %v746, %v920
    %v922 = vand.u32 %v921, 4294901760
    %v923 = vsub.f32 %v921, %v922
    %v924 = vand.u32 %v923, 4294901760
    %925 = vmatpush1.msra.mxu0 %v924
    %926 = vmatprep.subr.mxu0 0.0
    %v927 = vand.u32 %v747, 4294901760
    %v928 = vsub.f32 %v747, %v927
    %v929 = vand.u32 %v928, 4294901760
    %v930 = vsub.f32 %v928, %v929
    %v931 = vand.u32 %v930, 4294901760
    %932 = vmatpush1.msra.mxu0 %v931
    %933 = vmatprep.subr.mxu0 0.0
    %v934 = vand.u32 %v748, 4294901760
    %v935 = vsub.f32 %v748, %v934
    %v936 = vand.u32 %v935, 4294901760
    %v937 = vsub.f32 %v935, %v936
    %v938 = vand.u32 %v937, 4294901760
    %939 = vmatpush1.msra.mxu0 %v938
    %940 = vmatprep.subr.mxu0 0.0
    %v941 = vand.u32 %v749, 4294901760
    %v942 = vsub.f32 %v749, %v941
    %v943 = vand.u32 %v942, 4294901760
    %v944 = vsub.f32 %v942, %v943
    %v945 = vand.u32 %v944, 4294901760
    %946 = vmatpush1.msra.mxu0 %v945
    %947 = vmatprep.subr.mxu0 0.0
    %v948 = vand.u32 %v750, 4294901760
    %v949 = vsub.f32 %v750, %v948
    %v950 = vand.u32 %v949, 4294901760
    %v951 = vsub.f32 %v949, %v950
    %v952 = vand.u32 %v951, 4294901760
    %953 = vmatpush1.msra.mxu0 %v952
    %954 = vmatprep.subr.mxu0 0.0
    %955 = vmatpush1.msra.mxu0 0.0
    %956 = vmatprep.subr.mxu0 0.0
    %957 = vmatpush1.msra.mxu0 0.0
    %958 = vmatprep.subr.mxu0 0.0
    %959 = vmatpush1.msra.mxu0 0.0
    %960 = vmatprep.subr.mxu0 0.0
    %961 = vmatpush1.msra.mxu0 0.0
    %962 = vmatprep.subr.mxu0 0.0
    %963 = vmatpush1.msra.mxu0 0.0
    %964 = vmatprep.subr.mxu0 0.0
    %965 = vmatpush1.msra.mxu0 0.0
    %966 = vmatprep.subr.mxu0 0.0
    %967 = vmatpush1.msra.mxu0 0.0
    %968 = vmatprep.subr.mxu0 0.0
    %969 = vmatpush1.msra.mxu0 0.0
    %970 = vmatprep.subr.mxu0 0.0
    %971 = vmatpush1.msra.mxu0 0.0
    %972 = vmatprep.subr.mxu0 0.0
    %973 = vmatpush1.msra.mxu0 0.0
    %974 = vmatprep.subr.mxu0 0.0
    %975 = vmatpush1.msra.mxu0 0.0
    %976 = vmatprep.subr.mxu0 0.0
    %977 = vmatpush1.msra.mxu0 0.0
    %978 = vmatprep.subr.mxu0 0.0
    %979 = vmatpush1.msra.mxu0 0.0
    %980 = vmatprep.subr.mxu0 0.0
    %981 = vmatpush1.msra.mxu0 0.0
    %982 = vmatprep.subr.mxu0 0.0
    %983 = vmatpush1.msra.mxu0 0.0
    %984 = vmatprep.subr.mxu0 0.0
    %985 = vmatpush1.msra.mxu0 0.0
    %986 = vmatprep.mubr.f32.mxu0 0.0
    %v987 = vand.u32 %v734, 4294901760
    %988 = vmatmul.mubr.f32.gmra.mrb[0].mxu0 %v987
    %v989 = vpop.f32.mrb[0].mxu0
    %v990 = vadd.f32 %v839, %v989
    %v991 = vpop.f32.mrb[0].mxu0
    %992 = vdwg.mxu0
    %993 = vmatprep.subr.mxu0 0.0
    %v994 = vand.u32 %v735, 4294901760
    %v995 = vsub.f32 %v735, %v994
    %996 = vmatpush1.msra.mxu0 %v995
    %997 = vmatprep.subr.mxu0 0.0
    %v998 = vand.u32 %v736, 4294901760
    %v999 = vsub.f32 %v736, %v998
    %1000 = vmatpush1.msra.mxu0 %v999
    %1001 = vmatprep.subr.mxu0 0.0
    %v1002 = vand.u32 %v737, 4294901760
    %v1003 = vsub.f32 %v737, %v1002
    %1004 = vmatpush1.msra.mxu0 %v1003
    %1005 = vmatprep.subr.mxu0 0.0
    %v1006 = vand.u32 %v738, 4294901760
    %v1007 = vsub.f32 %v738, %v1006
    %1008 = vmatpush1.msra.mxu0 %v1007
    %1009 = vmatprep.subr.mxu0 0.0
    %v1010 = vand.u32 %v739, 4294901760
    %v1011 = vsub.f32 %v739, %v1010
    %1012 = vmatpush1.msra.mxu0 %v1011
    %1013 = vmatprep.subr.mxu0 0.0
    %v1014 = vand.u32 %v740, 4294901760
    %v1015 = vsub.f32 %v740, %v1014
    %1016 = vmatpush1.msra.mxu0 %v1015
    %1017 = vmatprep.subr.mxu0 0.0
    %v1018 = vand.u32 %v741, 4294901760
    %v1019 = vsub.f32 %v741, %v1018
    %1020 = vmatpush1.msra.mxu0 %v1019
    %1021 = vmatprep.subr.mxu0 0.0
    %v1022 = vand.u32 %v742, 4294901760
    %v1023 = vsub.f32 %v742, %v1022
    %1024 = vmatpush1.msra.mxu0 %v1023
    %1025 = vmatprep.subr.mxu0 0.0
    %v1026 = vand.u32 %v743, 4294901760
    %v1027 = vsub.f32 %v743, %v1026
    %1028 = vmatpush1.msra.mxu0 %v1027
    %1029 = vmatprep.subr.mxu0 0.0
    %v1030 = vand.u32 %v744, 4294901760
    %v1031 = vsub.f32 %v744, %v1030
    %1032 = vmatpush1.msra.mxu0 %v1031
    %1033 = vmatprep.subr.mxu0 0.0
    %v1034 = vand.u32 %v745, 4294901760
    %v1035 = vsub.f32 %v745, %v1034
    %1036 = vmatpush1.msra.mxu0 %v1035
    %1037 = vmatprep.subr.mxu0 0.0
    %v1038 = vand.u32 %v746, 4294901760
    %v1039 = vsub.f32 %v746, %v1038
    %1040 = vmatpush1.msra.mxu0 %v1039
    %1041 = vmatprep.subr.mxu0 0.0
    %v1042 = vand.u32 %v747, 4294901760
    %v1043 = vsub.f32 %v747, %v1042
    %1044 = vmatpush1.msra.mxu0 %v1043
    %1045 = vmatprep.subr.mxu0 0.0
    %v1046 = vand.u32 %v748, 4294901760
    %v1047 = vsub.f32 %v748, %v1046
    %1048 = vmatpush1.msra.mxu0 %v1047
    %1049 = vmatprep.subr.mxu0 0.0
    %v1050 = vand.u32 %v749, 4294901760
    %v1051 = vsub.f32 %v749, %v1050
    %1052 = vmatpush1.msra.mxu0 %v1051
    %1053 = vmatprep.subr.mxu0 0.0
    %v1054 = vand.u32 %v750, 4294901760
    %v1055 = vsub.f32 %v750, %v1054
    %1056 = vmatpush1.msra.mxu0 %v1055
    %1057 = vmatprep.subr.mxu0 0.0
    %1058 = vmatpush1.msra.mxu0 0.0
    %1059 = vmatprep.subr.mxu0 0.0
    %1060 = vmatpush1.msra.mxu0 0.0
    %1061 = vmatprep.subr.mxu0 0.0
    %1062 = vmatpush1.msra.mxu0 0.0
    %1063 = vmatprep.subr.mxu0 0.0
    %1064 = vmatpush1.msra.mxu0 0.0
    %1065 = vmatprep.subr.mxu0 0.0
    %1066 = vmatpush1.msra.mxu0 0.0
    %1067 = vmatprep.subr.mxu0 0.0
    %1068 = vmatpush1.msra.mxu0 0.0
    %1069 = vmatprep.subr.mxu0 0.0
    %1070 = vmatpush1.msra.mxu0 0.0
    %1071 = vmatprep.subr.mxu0 0.0
    %1072 = vmatpush1.msra.mxu0 0.0
    %1073 = vmatprep.subr.mxu0 0.0
    %1074 = vmatpush1.msra.mxu0 0.0
    %1075 = vmatprep.subr.mxu0 0.0
    %1076 = vmatpush1.msra.mxu0 0.0
    %1077 = vmatprep.subr.mxu0 0.0
    %1078 = vmatpush1.msra.mxu0 0.0
    %1079 = vmatprep.subr.mxu0 0.0
    %1080 = vmatpush1.msra.mxu0 0.0
    %1081 = vmatprep.subr.mxu0 0.0
    %1082 = vmatpush1.msra.mxu0 0.0
    %1083 = vmatprep.subr.mxu0 0.0
    %1084 = vmatpush1.msra.mxu0 0.0
    %1085 = vmatprep.subr.mxu0 0.0
    %1086 = vmatpush1.msra.mxu0 0.0
    %1087 = vmatprep.subr.mxu0 0.0
    %1088 = vmatpush1.msra.mxu0 0.0
    %1089 = vmatprep.mubr.f32.mxu0 0.0
    %v1090 = vand.u32 %v734, 4294901760
    %v1091 = vsub.f32 %v734, %v1090
    %1092 = vmatmul.mubr.f32.gmra.mrb[0].mxu0 %v1091
    %v1093 = vpop.f32.mrb[0].mxu0
    %v1094 = vadd.f32 %v990, %v1093
    %v1095 = vpop.f32.mrb[0].mxu0
    %1096 = vdwg.mxu0
    %1097 = vmatprep.subr.mxu0 0.0
    %v1098 = vand.u32 %v735, 4294901760
    %1099 = vmatpush1.msra.mxu0 %v1098
    %1100 = vmatprep.subr.mxu0 0.0
    %v1101 = vand.u32 %v736, 4294901760
    %1102 = vmatpush1.msra.mxu0 %v1101
    %1103 = vmatprep.subr.mxu0 0.0
    %v1104 = vand.u32 %v737, 4294901760
    %1105 = vmatpush1.msra.mxu0 %v1104
    %1106 = vmatprep.subr.mxu0 0.0
    %v1107 = vand.u32 %v738, 4294901760
    %1108 = vmatpush1.msra.mxu0 %v1107
    %1109 = vmatprep.subr.mxu0 0.0
    %v1110 = vand.u32 %v739, 4294901760
    %1111 = vmatpush1.msra.mxu0 %v1110
    %1112 = vmatprep.subr.mxu0 0.0
    %v1113 = vand.u32 %v740, 4294901760
    %1114 = vmatpush1.msra.mxu0 %v1113
    %1115 = vmatprep.subr.mxu0 0.0
    %v1116 = vand.u32 %v741, 4294901760
    %1117 = vmatpush1.msra.mxu0 %v1116
    %1118 = vmatprep.subr.mxu0 0.0
    %v1119 = vand.u32 %v742, 4294901760
    %1120 = vmatpush1.msra.mxu0 %v1119
    %1121 = vmatprep.subr.mxu0 0.0
    %v1122 = vand.u32 %v743, 4294901760
    %1123 = vmatpush1.msra.mxu0 %v1122
    %1124 = vmatprep.subr.mxu0 0.0
    %v1125 = vand.u32 %v744, 4294901760
    %1126 = vmatpush1.msra.mxu0 %v1125
    %1127 = vmatprep.subr.mxu0 0.0
    %v1128 = vand.u32 %v745, 4294901760
    %1129 = vmatpush1.msra.mxu0 %v1128
    %1130 = vmatprep.subr.mxu0 0.0
    %v1131 = vand.u32 %v746, 4294901760
    %1132 = vmatpush1.msra.mxu0 %v1131
    %1133 = vmatprep.subr.mxu0 0.0
    %v1134 = vand.u32 %v747, 4294901760
    %1135 = vmatpush1.msra.mxu0 %v1134
    %1136 = vmatprep.subr.mxu0 0.0
    %v1137 = vand.u32 %v748, 4294901760
    %1138 = vmatpush1.msra.mxu0 %v1137
    %1139 = vmatprep.subr.mxu0 0.0
    %v1140 = vand.u32 %v749, 4294901760
    %1141 = vmatpush1.msra.mxu0 %v1140
    %1142 = vmatprep.subr.mxu0 0.0
    %v1143 = vand.u32 %v750, 4294901760
    %1144 = vmatpush1.msra.mxu0 %v1143
    %1145 = vmatprep.subr.mxu0 0.0
    %1146 = vmatpush1.msra.mxu0 0.0
    %1147 = vmatprep.subr.mxu0 0.0
    %1148 = vmatpush1.msra.mxu0 0.0
    %1149 = vmatprep.subr.mxu0 0.0
    %1150 = vmatpush1.msra.mxu0 0.0
    %1151 = vmatprep.subr.mxu0 0.0
    %1152 = vmatpush1.msra.mxu0 0.0
    %1153 = vmatprep.subr.mxu0 0.0
    %1154 = vmatpush1.msra.mxu0 0.0
    %1155 = vmatprep.subr.mxu0 0.0
    %1156 = vmatpush1.msra.mxu0 0.0
    %1157 = vmatprep.subr.mxu0 0.0
    %1158 = vmatpush1.msra.mxu0 0.0
    %1159 = vmatprep.subr.mxu0 0.0
    %1160 = vmatpush1.msra.mxu0 0.0
    %1161 = vmatprep.subr.mxu0 0.0
    %1162 = vmatpush1.msra.mxu0 0.0
    %1163 = vmatprep.subr.mxu0 0.0
    %1164 = vmatpush1.msra.mxu0 0.0
    %1165 = vmatprep.subr.mxu0 0.0
    %1166 = vmatpush1.msra.mxu0 0.0
    %1167 = vmatprep.subr.mxu0 0.0
    %1168 = vmatpush1.msra.mxu0 0.0
    %1169 = vmatprep.subr.mxu0 0.0
    %1170 = vmatpush1.msra.mxu0 0.0
    %1171 = vmatprep.subr.mxu0 0.0
    %1172 = vmatpush1.msra.mxu0 0.0
    %1173 = vmatprep.subr.mxu0 0.0
    %1174 = vmatpush1.msra.mxu0 0.0
    %1175 = vmatprep.subr.mxu0 0.0
    %1176 = vmatpush1.msra.mxu0 0.0
    %1177 = vmatprep.mubr.f32.mxu0 0.0
    %v1178 = vand.u32 %v734, 4294901760
    %v1179 = vsub.f32 %v734, %v1178
    %v1180 = vand.u32 %v1179, 4294901760
    %1181 = vmatmul.mubr.f32.gmra.mrb[0].mxu0 %v1180
    %v1182 = vpop.f32.mrb[0].mxu0
    %v1183 = vadd.f32 %v1094, %v1182
    %v1184 = vpop.f32.mrb[0].mxu0
    %1185 = vdwg.mxu0
    %1186 = vmatprep.subr.mxu0 0.0
    %v1187 = vand.u32 %v735, 4294901760
    %v1188 = vsub.f32 %v735, %v1187
    %v1189 = vand.u32 %v1188, 4294901760
    %1190 = vmatpush1.msra.mxu0 %v1189
    %1191 = vmatprep.subr.mxu0 0.0
    %v1192 = vand.u32 %v736, 4294901760
    %v1193 = vsub.f32 %v736, %v1192
    %v1194 = vand.u32 %v1193, 4294901760
    %1195 = vmatpush1.msra.mxu0 %v1194
    %1196 = vmatprep.subr.mxu0 0.0
    %v1197 = vand.u32 %v737, 4294901760
    %v1198 = vsub.f32 %v737, %v1197
    %v1199 = vand.u32 %v1198, 4294901760
    %1200 = vmatpush1.msra.mxu0 %v1199
    %1201 = vmatprep.subr.mxu0 0.0
    %v1202 = vand.u32 %v738, 4294901760
    %v1203 = vsub.f32 %v738, %v1202
    %v1204 = vand.u32 %v1203, 4294901760
    %1205 = vmatpush1.msra.mxu0 %v1204
    %1206 = vmatprep.subr.mxu0 0.0
    %v1207 = vand.u32 %v739, 4294901760
    %v1208 = vsub.f32 %v739, %v1207
    %v1209 = vand.u32 %v1208, 4294901760
    %1210 = vmatpush1.msra.mxu0 %v1209
    %1211 = vmatprep.subr.mxu0 0.0
    %v1212 = vand.u32 %v740, 4294901760
    %v1213 = vsub.f32 %v740, %v1212
    %v1214 = vand.u32 %v1213, 4294901760
    %1215 = vmatpush1.msra.mxu0 %v1214
    %1216 = vmatprep.subr.mxu0 0.0
    %v1217 = vand.u32 %v741, 4294901760
    %v1218 = vsub.f32 %v741, %v1217
    %v1219 = vand.u32 %v1218, 4294901760
    %1220 = vmatpush1.msra.mxu0 %v1219
    %1221 = vmatprep.subr.mxu0 0.0
    %v1222 = vand.u32 %v742, 4294901760
    %v1223 = vsub.f32 %v742, %v1222
    %v1224 = vand.u32 %v1223, 4294901760
    %1225 = vmatpush1.msra.mxu0 %v1224
    %1226 = vmatprep.subr.mxu0 0.0
    %v1227 = vand.u32 %v743, 4294901760
    %v1228 = vsub.f32 %v743, %v1227
    %v1229 = vand.u32 %v1228, 4294901760
    %1230 = vmatpush1.msra.mxu0 %v1229
    %1231 = vmatprep.subr.mxu0 0.0
    %v1232 = vand.u32 %v744, 4294901760
    %v1233 = vsub.f32 %v744, %v1232
    %v1234 = vand.u32 %v1233, 4294901760
    %1235 = vmatpush1.msra.mxu0 %v1234
    %1236 = vmatprep.subr.mxu0 0.0
    %v1237 = vand.u32 %v745, 4294901760
    %v1238 = vsub.f32 %v745, %v1237
    %v1239 = vand.u32 %v1238, 4294901760
    %1240 = vmatpush1.msra.mxu0 %v1239
    %1241 = vmatprep.subr.mxu0 0.0
    %v1242 = vand.u32 %v746, 4294901760
    %v1243 = vsub.f32 %v746, %v1242
    %v1244 = vand.u32 %v1243, 4294901760
    %1245 = vmatpush1.msra.mxu0 %v1244
    %1246 = vmatprep.subr.mxu0 0.0
    %v1247 = vand.u32 %v747, 4294901760
    %v1248 = vsub.f32 %v747, %v1247
    %v1249 = vand.u32 %v1248, 4294901760
    %1250 = vmatpush1.msra.mxu0 %v1249
    %1251 = vmatprep.subr.mxu0 0.0
    %v1252 = vand.u32 %v748, 4294901760
    %v1253 = vsub.f32 %v748, %v1252
    %v1254 = vand.u32 %v1253, 4294901760
    %1255 = vmatpush1.msra.mxu0 %v1254
    %1256 = vmatprep.subr.mxu0 0.0
    %v1257 = vand.u32 %v749, 4294901760
    %v1258 = vsub.f32 %v749, %v1257
    %v1259 = vand.u32 %v1258, 4294901760
    %1260 = vmatpush1.msra.mxu0 %v1259
    %1261 = vmatprep.subr.mxu0 0.0
    %v1262 = vand.u32 %v750, 4294901760
    %v1263 = vsub.f32 %v750, %v1262
    %v1264 = vand.u32 %v1263, 4294901760
    %1265 = vmatpush1.msra.mxu0 %v1264
    %1266 = vmatprep.subr.mxu0 0.0
    %1267 = vmatpush1.msra.mxu0 0.0
    %1268 = vmatprep.subr.mxu0 0.0
    %1269 = vmatpush1.msra.mxu0 0.0
    %1270 = vmatprep.subr.mxu0 0.0
    %1271 = vmatpush1.msra.mxu0 0.0
    %1272 = vmatprep.subr.mxu0 0.0
    %1273 = vmatpush1.msra.mxu0 0.0
    %1274 = vmatprep.subr.mxu0 0.0
    %1275 = vmatpush1.msra.mxu0 0.0
    %1276 = vmatprep.subr.mxu0 0.0
    %1277 = vmatpush1.msra.mxu0 0.0
    %1278 = vmatprep.subr.mxu0 0.0
    %1279 = vmatpush1.msra.mxu0 0.0
    %1280 = vmatprep.subr.mxu0 0.0
    %1281 = vmatpush1.msra.mxu0 0.0
    %1282 = vmatprep.subr.mxu0 0.0
    %1283 = vmatpush1.msra.mxu0 0.0
    %1284 = vmatprep.subr.mxu0 0.0
    %1285 = vmatpush1.msra.mxu0 0.0
    %1286 = vmatprep.subr.mxu0 0.0
    %1287 = vmatpush1.msra.mxu0 0.0
    %1288 = vmatprep.subr.mxu0 0.0
    %1289 = vmatpush1.msra.mxu0 0.0
    %1290 = vmatprep.subr.mxu0 0.0
    %1291 = vmatpush1.msra.mxu0 0.0
    %1292 = vmatprep.subr.mxu0 0.0
    %1293 = vmatpush1.msra.mxu0 0.0
    %1294 = vmatprep.subr.mxu0 0.0
    %1295 = vmatpush1.msra.mxu0 0.0
    %1296 = vmatprep.subr.mxu0 0.0
    %1297 = vmatpush1.msra.mxu0 0.0
    %1298 = vmatprep.mubr.f32.mxu0 0.0
    %v1299 = vand.u32 %v734, 4294901760
    %1300 = vmatmul.mubr.f32.gmra.mrb[0].mxu0 %v1299
    %v1301 = vpop.f32.mrb[0].mxu0
    %v1302 = vadd.f32 %v1183, %v1301
    %v1303 = vpop.f32.mrb[0].mxu0
    %1304 = vdwg.mxu0
    %1305 = vmatprep.subr.mxu0 0.0
    %v1306 = vand.u32 %v735, 4294901760
    %1307 = vmatpush1.msra.mxu0 %v1306
    %1308 = vmatprep.subr.mxu0 0.0
    %v1309 = vand.u32 %v736, 4294901760
    %1310 = vmatpush1.msra.mxu0 %v1309
    %1311 = vmatprep.subr.mxu0 0.0
    %v1312 = vand.u32 %v737, 4294901760
    %1313 = vmatpush1.msra.mxu0 %v1312
    %1314 = vmatprep.subr.mxu0 0.0
    %v1315 = vand.u32 %v738, 4294901760
    %1316 = vmatpush1.msra.mxu0 %v1315
    %1317 = vmatprep.subr.mxu0 0.0
    %v1318 = vand.u32 %v739, 4294901760
    %1319 = vmatpush1.msra.mxu0 %v1318
    %1320 = vmatprep.subr.mxu0 0.0
    %v1321 = vand.u32 %v740, 4294901760
    %1322 = vmatpush1.msra.mxu0 %v1321
    %1323 = vmatprep.subr.mxu0 0.0
    %v1324 = vand.u32 %v741, 4294901760
    %1325 = vmatpush1.msra.mxu0 %v1324
    %1326 = vmatprep.subr.mxu0 0.0
    %v1327 = vand.u32 %v742, 4294901760
    %1328 = vmatpush1.msra.mxu0 %v1327
    %1329 = vmatprep.subr.mxu0 0.0
    %v1330 = vand.u32 %v743, 4294901760
    %1331 = vmatpush1.msra.mxu0 %v1330
    %1332 = vmatprep.subr.mxu0 0.0
    %v1333 = vand.u32 %v744, 4294901760
    %1334 = vmatpush1.msra.mxu0 %v1333
    %1335 = vmatprep.subr.mxu0 0.0
    %v1336 = vand.u32 %v745, 4294901760
    %1337 = vmatpush1.msra.mxu0 %v1336
    %1338 = vmatprep.subr.mxu0 0.0
    %v1339 = vand.u32 %v746, 4294901760
    %1340 = vmatpush1.msra.mxu0 %v1339
    %1341 = vmatprep.subr.mxu0 0.0
    %v1342 = vand.u32 %v747, 4294901760
    %1343 = vmatpush1.msra.mxu0 %v1342
    %1344 = vmatprep.subr.mxu0 0.0
    %v1345 = vand.u32 %v748, 4294901760
    %1346 = vmatpush1.msra.mxu0 %v1345
    %1347 = vmatprep.subr.mxu0 0.0
    %v1348 = vand.u32 %v749, 4294901760
    %1349 = vmatpush1.msra.mxu0 %v1348
    %1350 = vmatprep.subr.mxu0 0.0
    %v1351 = vand.u32 %v750, 4294901760
    %1352 = vmatpush1.msra.mxu0 %v1351
    %1353 = vmatprep.subr.mxu0 0.0
    %1354 = vmatpush1.msra.mxu0 0.0
    %1355 = vmatprep.subr.mxu0 0.0
    %1356 = vmatpush1.msra.mxu0 0.0
    %1357 = vmatprep.subr.mxu0 0.0
    %1358 = vmatpush1.msra.mxu0 0.0
    %1359 = vmatprep.subr.mxu0 0.0
    %1360 = vmatpush1.msra.mxu0 0.0
    %1361 = vmatprep.subr.mxu0 0.0
    %1362 = vmatpush1.msra.mxu0 0.0
    %1363 = vmatprep.subr.mxu0 0.0
    %1364 = vmatpush1.msra.mxu0 0.0
    %1365 = vmatprep.subr.mxu0 0.0
    %1366 = vmatpush1.msra.mxu0 0.0
    %1367 = vmatprep.subr.mxu0 0.0
    %1368 = vmatpush1.msra.mxu0 0.0
    %1369 = vmatprep.subr.mxu0 0.0
    %1370 = vmatpush1.msra.mxu0 0.0
    %1371 = vmatprep.subr.mxu0 0.0
    %1372 = vmatpush1.msra.mxu0 0.0
    %1373 = vmatprep.subr.mxu0 0.0
    %1374 = vmatpush1.msra.mxu0 0.0
    %1375 = vmatprep.subr.mxu0 0.0
    %1376 = vmatpush1.msra.mxu0 0.0
    %1377 = vmatprep.subr.mxu0 0.0
    %1378 = vmatpush1.msra.mxu0 0.0
    %1379 = vmatprep.subr.mxu0 0.0
    %1380 = vmatpush1.msra.mxu0 0.0
    %1381 = vmatprep.subr.mxu0 0.0
    %1382 = vmatpush1.msra.mxu0 0.0
    %1383 = vmatprep.subr.mxu0 0.0
    %1384 = vmatpush1.msra.mxu0 0.0
    %1385 = vmatprep.mubr.f32.mxu0 0.0
    %v1386 = vand.u32 %v734, 4294901760
    %1387 = vmatmul.mubr.f32.gmra.mrb[0].mxu0 %v1386
    %v1388 = vpop.f32.mrb[0].mxu0
    %v1389 = vadd.f32 %v1302, %v1388
    %v1390 = vpop.f32.mrb[0].mxu0
    %1391 = vdwg.mxu0
    %v1392 = vtanh.pop %v1389
    %v1393 = vld [vmem:[#allocation9] sm:$0xff]
    %v1394 = vld [vmem:[#allocation9 + $0x8] sm:$0xff]
    %v1395 = vld [vmem:[#allocation9 + $0x10] sm:$0xff]
    %v1396 = vld [vmem:[#allocation9 + $0x18] sm:$0xff]
    %v1397 = vld [vmem:[#allocation9 + $0x20] sm:$0xff]
    %v1398 = vld [vmem:[#allocation9 + $0x28] sm:$0xff]
    %v1399 = vld [vmem:[#allocation9 + $0x30] sm:$0xff]
    %v1400 = vld [vmem:[#allocation9 + $0x38] sm:$0xff]
    %v1401 = vld [vmem:[#allocation9 + $0x40] sm:$0xff]
    %v1402 = vld [vmem:[#allocation9 + $0x48] sm:$0xff]
    %v1403 = vld [vmem:[#allocation9 + $0x50] sm:$0xff]
    %v1404 = vld [vmem:[#allocation9 + $0x58] sm:$0xff]
    %v1405 = vld [vmem:[#allocation9 + $0x60] sm:$0xff]
    %v1406 = vld [vmem:[#allocation9 + $0x68] sm:$0xff]
    %v1407 = vld [vmem:[#allocation9 + $0x70] sm:$0xff]
    %v1408 = vld [vmem:[#allocation9 + $0x78] sm:$0xff]
    %1409 = vmatprep.subr.mxu0 0.0
    %v1410 = vand.u32 %v1393, 4294901760
    %1411 = vmatpush1.msra.mxu0 %v1410
    %1412 = vmatprep.subr.mxu0 0.0
    %v1413 = vand.u32 %v1394, 4294901760
    %1414 = vmatpush1.msra.mxu0 %v1413
    %1415 = vmatprep.subr.mxu0 0.0
    %v1416 = vand.u32 %v1395, 4294901760
    %1417 = vmatpush1.msra.mxu0 %v1416
    %1418 = vmatprep.subr.mxu0 0.0
    %v1419 = vand.u32 %v1396, 4294901760
    %1420 = vmatpush1.msra.mxu0 %v1419
    %1421 = vmatprep.subr.mxu0 0.0
    %v1422 = vand.u32 %v1397, 4294901760
    %1423 = vmatpush1.msra.mxu0 %v1422
    %1424 = vmatprep.subr.mxu0 0.0
    %v1425 = vand.u32 %v1398, 4294901760
    %1426 = vmatpush1.msra.mxu0 %v1425
    %1427 = vmatprep.subr.mxu0 0.0
    %v1428 = vand.u32 %v1399, 4294901760
    %1429 = vmatpush1.msra.mxu0 %v1428
    %1430 = vmatprep.subr.mxu0 0.0
    %v1431 = vand.u32 %v1400, 4294901760
    %1432 = vmatpush1.msra.mxu0 %v1431
    %1433 = vmatprep.subr.mxu0 0.0
    %v1434 = vand.u32 %v1401, 4294901760
    %1435 = vmatpush1.msra.mxu0 %v1434
    %1436 = vmatprep.subr.mxu0 0.0
    %v1437 = vand.u32 %v1402, 4294901760
    %1438 = vmatpush1.msra.mxu0 %v1437
    %1439 = vmatprep.subr.mxu0 0.0
    %v1440 = vand.u32 %v1403, 4294901760
    %1441 = vmatpush1.msra.mxu0 %v1440
    %1442 = vmatprep.subr.mxu0 0.0
    %v1443 = vand.u32 %v1404, 4294901760
    %1444 = vmatpush1.msra.mxu0 %v1443
    %1445 = vmatprep.subr.mxu0 0.0
    %v1446 = vand.u32 %v1405, 4294901760
    %1447 = vmatpush1.msra.mxu0 %v1446
    %1448 = vmatprep.subr.mxu0 0.0
    %v1449 = vand.u32 %v1406, 4294901760
    %1450 = vmatpush1.msra.mxu0 %v1449
    %1451 = vmatprep.subr.mxu0 0.0
    %v1452 = vand.u32 %v1407, 4294901760
    %1453 = vmatpush1.msra.mxu0 %v1452
    %1454 = vmatprep.subr.mxu0 0.0
    %v1455 = vand.u32 %v1408, 4294901760
    %1456 = vmatpush1.msra.mxu0 %v1455
    %1457 = vmatprep.subr.mxu0 0.0
    %1458 = vmatpush1.msra.mxu0 0.0
    %1459 = vmatprep.subr.mxu0 0.0
    %1460 = vmatpush1.msra.mxu0 0.0
    %1461 = vmatprep.subr.mxu0 0.0
    %1462 = vmatpush1.msra.mxu0 0.0
    %1463 = vmatprep.subr.mxu0 0.0
    %1464 = vmatpush1.msra.mxu0 0.0
    %1465 = vmatprep.subr.mxu0 0.0
    %1466 = vmatpush1.msra.mxu0 0.0
    %1467 = vmatprep.subr.mxu0 0.0
    %1468 = vmatpush1.msra.mxu0 0.0
    %1469 = vmatprep.subr.mxu0 0.0
    %1470 = vmatpush1.msra.mxu0 0.0
    %1471 = vmatprep.subr.mxu0 0.0
    %1472 = vmatpush1.msra.mxu0 0.0
    %1473 = vmatprep.subr.mxu0 0.0
    %1474 = vmatpush1.msra.mxu0 0.0
    %1475 = vmatprep.subr.mxu0 0.0
    %1476 = vmatpush1.msra.mxu0 0.0
    %1477 = vmatprep.subr.mxu0 0.0
    %1478 = vmatpush1.msra.mxu0 0.0
    %1479 = vmatprep.subr.mxu0 0.0
    %1480 = vmatpush1.msra.mxu0 0.0
    %1481 = vmatprep.subr.mxu0 0.0
    %1482 = vmatpush1.msra.mxu0 0.0
    %1483 = vmatprep.subr.mxu0 0.0
    %1484 = vmatpush1.msra.mxu0 0.0
    %1485 = vmatprep.subr.mxu0 0.0
    %1486 = vmatpush1.msra.mxu0 0.0
    %1487 = vmatprep.subr.mxu0 0.0
    %1488 = vmatpush1.msra.mxu0 0.0
    %1489 = vmatprep.mubr.f32.mxu0 0.0
    %v1490 = vand.u32 %v1392, 4294901760
    %v1491 = vsub.f32 %v1392, %v1490
    %v1492 = vand.u32 %v1491, 4294901760
    %v1493 = vsub.f32 %v1491, %v1492
    %v1494 = vand.u32 %v1493, 4294901760
    %1495 = vmatmul.mubr.f32.gmra.mrb[0].mxu0 %v1494
    %v1496 = vpop.f32.mrb[0].mxu0
    %v1497 = vadd.f32 0.0, %v1496
    %v1498 = vpop.f32.mrb[0].mxu0
    %1499 = vdwg.mxu0
    %1500 = vmatprep.subr.mxu0 0.0
    %v1501 = vand.u32 %v1393, 4294901760
    %v1502 = vsub.f32 %v1393, %v1501
    %v1503 = vand.u32 %v1502, 4294901760
    %v1504 = vsub.f32 %v1502, %v1503
    %v1505 = vand.u32 %v1504, 4294901760
    %1506 = vmatpush1.msra.mxu0 %v1505
    %1507 = vmatprep.subr.mxu0 0.0
    %v1508 = vand.u32 %v1394, 4294901760
    %v1509 = vsub.f32 %v1394, %v1508
    %v1510 = vand.u32 %v1509, 4294901760
    %v1511 = vsub.f32 %v1509, %v1510
    %v1512 = vand.u32 %v1511, 4294901760
    %1513 = vmatpush1.msra.mxu0 %v1512
    %1514 = vmatprep.subr.mxu0 0.0
    %v1515 = vand.u32 %v1395, 4294901760
    %v1516 = vsub.f32 %v1395, %v1515
    %v1517 = vand.u32 %v1516, 4294901760
    %v1518 = vsub.f32 %v1516, %v1517
    %v1519 = vand.u32 %v1518, 4294901760
    %1520 = vmatpush1.msra.mxu0 %v1519
    %1521 = vmatprep.subr.mxu0 0.0
    %v1522 = vand.u32 %v1396, 4294901760
    %v1523 = vsub.f32 %v1396, %v1522
    %v1524 = vand.u32 %v1523, 4294901760
    %v1525 = vsub.f32 %v1523, %v1524
    %v1526 = vand.u32 %v1525, 4294901760
    %1527 = vmatpush1.msra.mxu0 %v1526
    %1528 = vmatprep.subr.mxu0 0.0
    %v1529 = vand.u32 %v1397, 4294901760
    %v1530 = vsub.f32 %v1397, %v1529
    %v1531 = vand.u32 %v1530, 4294901760
    %v1532 = vsub.f32 %v1530, %v1531
    %v1533 = vand.u32 %v1532, 4294901760
    %1534 = vmatpush1.msra.mxu0 %v1533
    %1535 = vmatprep.subr.mxu0 0.0
    %v1536 = vand.u32 %v1398, 4294901760
    %v1537 = vsub.f32 %v1398, %v1536
    %v1538 = vand.u32 %v1537, 4294901760
    %v1539 = vsub.f32 %v1537, %v1538
    %v1540 = vand.u32 %v1539, 4294901760
    %1541 = vmatpush1.msra.mxu0 %v1540
    %1542 = vmatprep.subr.mxu0 0.0
    %v1543 = vand.u32 %v1399, 4294901760
    %v1544 = vsub.f32 %v1399, %v1543
    %v1545 = vand.u32 %v1544, 4294901760
    %v1546 = vsub.f32 %v1544, %v1545
    %v1547 = vand.u32 %v1546, 4294901760
    %1548 = vmatpush1.msra.mxu0 %v1547
    %1549 = vmatprep.subr.mxu0 0.0
    %v1550 = vand.u32 %v1400, 4294901760
    %v1551 = vsub.f32 %v1400, %v1550
    %v1552 = vand.u32 %v1551, 4294901760
    %v1553 = vsub.f32 %v1551, %v1552
    %v1554 = vand.u32 %v1553, 4294901760
    %1555 = vmatpush1.msra.mxu0 %v1554
    %1556 = vmatprep.subr.mxu0 0.0
    %v1557 = vand.u32 %v1401, 4294901760
    %v1558 = vsub.f32 %v1401, %v1557
    %v1559 = vand.u32 %v1558, 4294901760
    %v1560 = vsub.f32 %v1558, %v1559
    %v1561 = vand.u32 %v1560, 4294901760
    %1562 = vmatpush1.msra.mxu0 %v1561
    %1563 = vmatprep.subr.mxu0 0.0
    %v1564 = vand.u32 %v1402, 4294901760
    %v1565 = vsub.f32 %v1402, %v1564
    %v1566 = vand.u32 %v1565, 4294901760
    %v1567 = vsub.f32 %v1565, %v1566
    %v1568 = vand.u32 %v1567, 4294901760
    %1569 = vmatpush1.msra.mxu0 %v1568
    %1570 = vmatprep.subr.mxu0 0.0
    %v1571 = vand.u32 %v1403, 4294901760
    %v1572 = vsub.f32 %v1403, %v1571
    %v1573 = vand.u32 %v1572, 4294901760
    %v1574 = vsub.f32 %v1572, %v1573
    %v1575 = vand.u32 %v1574, 4294901760
    %1576 = vmatpush1.msra.mxu0 %v1575
    %1577 = vmatprep.subr.mxu0 0.0
    %v1578 = vand.u32 %v1404, 4294901760
    %v1579 = vsub.f32 %v1404, %v1578
    %v1580 = vand.u32 %v1579, 4294901760
    %v1581 = vsub.f32 %v1579, %v1580
    %v1582 = vand.u32 %v1581, 4294901760
    %1583 = vmatpush1.msra.mxu0 %v1582
    %1584 = vmatprep.subr.mxu0 0.0
    %v1585 = vand.u32 %v1405, 4294901760
    %v1586 = vsub.f32 %v1405, %v1585
    %v1587 = vand.u32 %v1586, 4294901760
    %v1588 = vsub.f32 %v1586, %v1587
    %v1589 = vand.u32 %v1588, 4294901760
    %1590 = vmatpush1.msra.mxu0 %v1589
    %1591 = vmatprep.subr.mxu0 0.0
    %v1592 = vand.u32 %v1406, 4294901760
    %v1593 = vsub.f32 %v1406, %v1592
    %v1594 = vand.u32 %v1593, 4294901760
    %v1595 = vsub.f32 %v1593, %v1594
    %v1596 = vand.u32 %v1595, 4294901760
    %1597 = vmatpush1.msra.mxu0 %v1596
    %1598 = vmatprep.subr.mxu0 0.0
    %v1599 = vand.u32 %v1407, 4294901760
    %v1600 = vsub.f32 %v1407, %v1599
    %v1601 = vand.u32 %v1600, 4294901760
    %v1602 = vsub.f32 %v1600, %v1601
    %v1603 = vand.u32 %v1602, 4294901760
    %1604 = vmatpush1.msra.mxu0 %v1603
    %1605 = vmatprep.subr.mxu0 0.0
    %v1606 = vand.u32 %v1408, 4294901760
    %v1607 = vsub.f32 %v1408, %v1606
    %v1608 = vand.u32 %v1607, 4294901760
    %v1609 = vsub.f32 %v1607, %v1608
    %v1610 = vand.u32 %v1609, 4294901760
    %1611 = vmatpush1.msra.mxu0 %v1610
    %1612 = vmatprep.subr.mxu0 0.0
    %1613 = vmatpush1.msra.mxu0 0.0
    %1614 = vmatprep.subr.mxu0 0.0
    %1615 = vmatpush1.msra.mxu0 0.0
    %1616 = vmatprep.subr.mxu0 0.0
    %1617 = vmatpush1.msra.mxu0 0.0
    %1618 = vmatprep.subr.mxu0 0.0
    %1619 = vmatpush1.msra.mxu0 0.0
    %1620 = vmatprep.subr.mxu0 0.0
    %1621 = vmatpush1.msra.mxu0 0.0
    %1622 = vmatprep.subr.mxu0 0.0
    %1623 = vmatpush1.msra.mxu0 0.0
    %1624 = vmatprep.subr.mxu0 0.0
    %1625 = vmatpush1.msra.mxu0 0.0
    %1626 = vmatprep.subr.mxu0 0.0
    %1627 = vmatpush1.msra.mxu0 0.0
    %1628 = vmatprep.subr.mxu0 0.0
    %1629 = vmatpush1.msra.mxu0 0.0
    %1630 = vmatprep.subr.mxu0 0.0
    %1631 = vmatpush1.msra.mxu0 0.0
    %1632 = vmatprep.subr.mxu0 0.0
    %1633 = vmatpush1.msra.mxu0 0.0
    %1634 = vmatprep.subr.mxu0 0.0
    %1635 = vmatpush1.msra.mxu0 0.0
    %1636 = vmatprep.subr.mxu0 0.0
    %1637 = vmatpush1.msra.mxu0 0.0
    %1638 = vmatprep.subr.mxu0 0.0
    %1639 = vmatpush1.msra.mxu0 0.0
    %1640 = vmatprep.subr.mxu0 0.0
    %1641 = vmatpush1.msra.mxu0 0.0
    %1642 = vmatprep.subr.mxu0 0.0
    %1643 = vmatpush1.msra.mxu0 0.0
    %1644 = vmatprep.mubr.f32.mxu0 0.0
    %v1645 = vand.u32 %v1392, 4294901760
    %1646 = vmatmul.mubr.f32.gmra.mrb[0].mxu0 %v1645
    %v1647 = vpop.f32.mrb[0].mxu0
    %v1648 = vadd.f32 %v1497, %v1647
    %v1649 = vpop.f32.mrb[0].mxu0
    %1650 = vdwg.mxu0
    %1651 = vmatprep.subr.mxu0 0.0
    %v1652 = vand.u32 %v1393, 4294901760
    %v1653 = vsub.f32 %v1393, %v1652
    %1654 = vmatpush1.msra.mxu0 %v1653
    %1655 = vmatprep.subr.mxu0 0.0
    %v1656 = vand.u32 %v1394, 4294901760
    %v1657 = vsub.f32 %v1394, %v1656
    %1658 = vmatpush1.msra.mxu0 %v1657
    %1659 = vmatprep.subr.mxu0 0.0
    %v1660 = vand.u32 %v1395, 4294901760
    %v1661 = vsub.f32 %v1395, %v1660
    %1662 = vmatpush1.msra.mxu0 %v1661
    %1663 = vmatprep.subr.mxu0 0.0
    %v1664 = vand.u32 %v1396, 4294901760
    %v1665 = vsub.f32 %v1396, %v1664
    %1666 = vmatpush1.msra.mxu0 %v1665
    %1667 = vmatprep.subr.mxu0 0.0
    %v1668 = vand.u32 %v1397, 4294901760
    %v1669 = vsub.f32 %v1397, %v1668
    %1670 = vmatpush1.msra.mxu0 %v1669
    %1671 = vmatprep.subr.mxu0 0.0
    %v1672 = vand.u32 %v1398, 4294901760
    %v1673 = vsub.f32 %v1398, %v1672
    %1674 = vmatpush1.msra.mxu0 %v1673
    %1675 = vmatprep.subr.mxu0 0.0
    %v1676 = vand.u32 %v1399, 4294901760
    %v1677 = vsub.f32 %v1399, %v1676
    %1678 = vmatpush1.msra.mxu0 %v1677
    %1679 = vmatprep.subr.mxu0 0.0
    %v1680 = vand.u32 %v1400, 4294901760
    %v1681 = vsub.f32 %v1400, %v1680
    %1682 = vmatpush1.msra.mxu0 %v1681
    %1683 = vmatprep.subr.mxu0 0.0
    %v1684 = vand.u32 %v1401, 4294901760
    %v1685 = vsub.f32 %v1401, %v1684
    %1686 = vmatpush1.msra.mxu0 %v1685
    %1687 = vmatprep.subr.mxu0 0.0
    %v1688 = vand.u32 %v1402, 4294901760
    %v1689 = vsub.f32 %v1402, %v1688
    %1690 = vmatpush1.msra.mxu0 %v1689
    %1691 = vmatprep.subr.mxu0 0.0
    %v1692 = vand.u32 %v1403, 4294901760
    %v1693 = vsub.f32 %v1403, %v1692
    %1694 = vmatpush1.msra.mxu0 %v1693
    %1695 = vmatprep.subr.mxu0 0.0
    %v1696 = vand.u32 %v1404, 4294901760
    %v1697 = vsub.f32 %v1404, %v1696
    %1698 = vmatpush1.msra.mxu0 %v1697
    %1699 = vmatprep.subr.mxu0 0.0
    %v1700 = vand.u32 %v1405, 4294901760
    %v1701 = vsub.f32 %v1405, %v1700
    %1702 = vmatpush1.msra.mxu0 %v1701
    %1703 = vmatprep.subr.mxu0 0.0
    %v1704 = vand.u32 %v1406, 4294901760
    %v1705 = vsub.f32 %v1406, %v1704
    %1706 = vmatpush1.msra.mxu0 %v1705
    %1707 = vmatprep.subr.mxu0 0.0
    %v1708 = vand.u32 %v1407, 4294901760
    %v1709 = vsub.f32 %v1407, %v1708
    %1710 = vmatpush1.msra.mxu0 %v1709
    %1711 = vmatprep.subr.mxu0 0.0
    %v1712 = vand.u32 %v1408, 4294901760
    %v1713 = vsub.f32 %v1408, %v1712
    %1714 = vmatpush1.msra.mxu0 %v1713
    %1715 = vmatprep.subr.mxu0 0.0
    %1716 = vmatpush1.msra.mxu0 0.0
    %1717 = vmatprep.subr.mxu0 0.0
    %1718 = vmatpush1.msra.mxu0 0.0
    %1719 = vmatprep.subr.mxu0 0.0
    %1720 = vmatpush1.msra.mxu0 0.0
    %1721 = vmatprep.subr.mxu0 0.0
    %1722 = vmatpush1.msra.mxu0 0.0
    %1723 = vmatprep.subr.mxu0 0.0
    %1724 = vmatpush1.msra.mxu0 0.0
    %1725 = vmatprep.subr.mxu0 0.0
    %1726 = vmatpush1.msra.mxu0 0.0
    %1727 = vmatprep.subr.mxu0 0.0
    %1728 = vmatpush1.msra.mxu0 0.0
    %1729 = vmatprep.subr.mxu0 0.0
    %1730 = vmatpush1.msra.mxu0 0.0
    %1731 = vmatprep.subr.mxu0 0.0
    %1732 = vmatpush1.msra.mxu0 0.0
    %1733 = vmatprep.subr.mxu0 0.0
    %1734 = vmatpush1.msra.mxu0 0.0
    %1735 = vmatprep.subr.mxu0 0.0
    %1736 = vmatpush1.msra.mxu0 0.0
    %1737 = vmatprep.subr.mxu0 0.0
    %1738 = vmatpush1.msra.mxu0 0.0
    %1739 = vmatprep.subr.mxu0 0.0
    %1740 = vmatpush1.msra.mxu0 0.0
    %1741 = vmatprep.subr.mxu0 0.0
    %1742 = vmatpush1.msra.mxu0 0.0
    %1743 = vmatprep.subr.mxu0 0.0
    %1744 = vmatpush1.msra.mxu0 0.0
    %1745 = vmatprep.subr.mxu0 0.0
    %1746 = vmatpush1.msra.mxu0 0.0
    %1747 = vmatprep.mubr.f32.mxu0 0.0
    %v1748 = vand.u32 %v1392, 4294901760
    %v1749 = vsub.f32 %v1392, %v1748
    %1750 = vmatmul.mubr.f32.gmra.mrb[0].mxu0 %v1749
    %v1751 = vpop.f32.mrb[0].mxu0
    %v1752 = vadd.f32 %v1648, %v1751
    %v1753 = vpop.f32.mrb[0].mxu0
    %1754 = vdwg.mxu0
    %1755 = vmatprep.subr.mxu0 0.0
    %v1756 = vand.u32 %v1393, 4294901760
    %1757 = vmatpush1.msra.mxu0 %v1756
    %1758 = vmatprep.subr.mxu0 0.0
    %v1759 = vand.u32 %v1394, 4294901760
    %1760 = vmatpush1.msra.mxu0 %v1759
    %1761 = vmatprep.subr.mxu0 0.0
    %v1762 = vand.u32 %v1395, 4294901760
    %1763 = vmatpush1.msra.mxu0 %v1762
    %1764 = vmatprep.subr.mxu0 0.0
    %v1765 = vand.u32 %v1396, 4294901760
    %1766 = vmatpush1.msra.mxu0 %v1765
    %1767 = vmatprep.subr.mxu0 0.0
    %v1768 = vand.u32 %v1397, 4294901760
    %1769 = vmatpush1.msra.mxu0 %v1768
    %1770 = vmatprep.subr.mxu0 0.0
    %v1771 = vand.u32 %v1398, 4294901760
    %1772 = vmatpush1.msra.mxu0 %v1771
    %1773 = vmatprep.subr.mxu0 0.0
    %v1774 = vand.u32 %v1399, 4294901760
    %1775 = vmatpush1.msra.mxu0 %v1774
    %1776 = vmatprep.subr.mxu0 0.0
    %v1777 = vand.u32 %v1400, 4294901760
    %1778 = vmatpush1.msra.mxu0 %v1777
    %1779 = vmatprep.subr.mxu0 0.0
    %v1780 = vand.u32 %v1401, 4294901760
    %1781 = vmatpush1.msra.mxu0 %v1780
    %1782 = vmatprep.subr.mxu0 0.0
    %v1783 = vand.u32 %v1402, 4294901760
    %1784 = vmatpush1.msra.mxu0 %v1783
    %1785 = vmatprep.subr.mxu0 0.0
    %v1786 = vand.u32 %v1403, 4294901760
    %1787 = vmatpush1.msra.mxu0 %v1786
    %1788 = vmatprep.subr.mxu0 0.0
    %v1789 = vand.u32 %v1404, 4294901760
    %1790 = vmatpush1.msra.mxu0 %v1789
    %1791 = vmatprep.subr.mxu0 0.0
    %v1792 = vand.u32 %v1405, 4294901760
    %1793 = vmatpush1.msra.mxu0 %v1792
    %1794 = vmatprep.subr.mxu0 0.0
    %v1795 = vand.u32 %v1406, 4294901760
    %1796 = vmatpush1.msra.mxu0 %v1795
    %1797 = vmatprep.subr.mxu0 0.0
    %v1798 = vand.u32 %v1407, 4294901760
    %1799 = vmatpush1.msra.mxu0 %v1798
    %1800 = vmatprep.subr.mxu0 0.0
    %v1801 = vand.u32 %v1408, 4294901760
    %1802 = vmatpush1.msra.mxu0 %v1801
    %1803 = vmatprep.subr.mxu0 0.0
    %1804 = vmatpush1.msra.mxu0 0.0
    %1805 = vmatprep.subr.mxu0 0.0
    %1806 = vmatpush1.msra.mxu0 0.0
    %1807 = vmatprep.subr.mxu0 0.0
    %1808 = vmatpush1.msra.mxu0 0.0
    %1809 = vmatprep.subr.mxu0 0.0
    %1810 = vmatpush1.msra.mxu0 0.0
    %1811 = vmatprep.subr.mxu0 0.0
    %1812 = vmatpush1.msra.mxu0 0.0
    %1813 = vmatprep.subr.mxu0 0.0
    %1814 = vmatpush1.msra.mxu0 0.0
    %1815 = vmatprep.subr.mxu0 0.0
    %1816 = vmatpush1.msra.mxu0 0.0
    %1817 = vmatprep.subr.mxu0 0.0
    %1818 = vmatpush1.msra.mxu0 0.0
    %1819 = vmatprep.subr.mxu0 0.0
    %1820 = vmatpush1.msra.mxu0 0.0
    %1821 = vmatprep.subr.mxu0 0.0
    %1822 = vmatpush1.msra.mxu0 0.0
    %1823 = vmatprep.subr.mxu0 0.0
    %1824 = vmatpush1.msra.mxu0 0.0
    %1825 = vmatprep.subr.mxu0 0.0
    %1826 = vmatpush1.msra.mxu0 0.0
    %1827 = vmatprep.subr.mxu0 0.0
    %1828 = vmatpush1.msra.mxu0 0.0
    %1829 = vmatprep.subr.mxu0 0.0
    %1830 = vmatpush1.msra.mxu0 0.0
    %1831 = vmatprep.subr.mxu0 0.0
    %1832 = vmatpush1.msra.mxu0 0.0
    %1833 = vmatprep.subr.mxu0 0.0
    %1834 = vmatpush1.msra.mxu0 0.0
    %1835 = vmatprep.mubr.f32.mxu0 0.0
    %v1836 = vand.u32 %v1392, 4294901760
    %v1837 = vsub.f32 %v1392, %v1836
    %v1838 = vand.u32 %v1837, 4294901760
    %1839 = vmatmul.mubr.f32.gmra.mrb[0].mxu0 %v1838
    %v1840 = vpop.f32.mrb[0].mxu0
    %v1841 = vadd.f32 %v1752, %v1840
    %v1842 = vpop.f32.mrb[0].mxu0
    %1843 = vdwg.mxu0
    %1844 = vmatprep.subr.mxu0 0.0
    %v1845 = vand.u32 %v1393, 4294901760
    %v1846 = vsub.f32 %v1393, %v1845
    %v1847 = vand.u32 %v1846, 4294901760
    %1848 = vmatpush1.msra.mxu0 %v1847
    %1849 = vmatprep.subr.mxu0 0.0
    %v1850 = vand.u32 %v1394, 4294901760
    %v1851 = vsub.f32 %v1394, %v1850
    %v1852 = vand.u32 %v1851, 4294901760
    %1853 = vmatpush1.msra.mxu0 %v1852
    %1854 = vmatprep.subr.mxu0 0.0
    %v1855 = vand.u32 %v1395, 4294901760
    %v1856 = vsub.f32 %v1395, %v1855
    %v1857 = vand.u32 %v1856, 4294901760
    %1858 = vmatpush1.msra.mxu0 %v1857
    %1859 = vmatprep.subr.mxu0 0.0
    %v1860 = vand.u32 %v1396, 4294901760
    %v1861 = vsub.f32 %v1396, %v1860
    %v1862 = vand.u32 %v1861, 4294901760
    %1863 = vmatpush1.msra.mxu0 %v1862
    %1864 = vmatprep.subr.mxu0 0.0
    %v1865 = vand.u32 %v1397, 4294901760
    %v1866 = vsub.f32 %v1397, %v1865
    %v1867 = vand.u32 %v1866, 4294901760
    %1868 = vmatpush1.msra.mxu0 %v1867
    %1869 = vmatprep.subr.mxu0 0.0
    %v1870 = vand.u32 %v1398, 4294901760
    %v1871 = vsub.f32 %v1398, %v1870
    %v1872 = vand.u32 %v1871, 4294901760
    %1873 = vmatpush1.msra.mxu0 %v1872
    %1874 = vmatprep.subr.mxu0 0.0
    %v1875 = vand.u32 %v1399, 4294901760
    %v1876 = vsub.f32 %v1399, %v1875
    %v1877 = vand.u32 %v1876, 4294901760
    %1878 = vmatpush1.msra.mxu0 %v1877
    %1879 = vmatprep.subr.mxu0 0.0
    %v1880 = vand.u32 %v1400, 4294901760
    %v1881 = vsub.f32 %v1400, %v1880
    %v1882 = vand.u32 %v1881, 4294901760
    %1883 = vmatpush1.msra.mxu0 %v1882
    %1884 = vmatprep.subr.mxu0 0.0
    %v1885 = vand.u32 %v1401, 4294901760
    %v1886 = vsub.f32 %v1401, %v1885
    %v1887 = vand.u32 %v1886, 4294901760
    %1888 = vmatpush1.msra.mxu0 %v1887
    %1889 = vmatprep.subr.mxu0 0.0
    %v1890 = vand.u32 %v1402, 4294901760
    %v1891 = vsub.f32 %v1402, %v1890
    %v1892 = vand.u32 %v1891, 4294901760
    %1893 = vmatpush1.msra.mxu0 %v1892
    %1894 = vmatprep.subr.mxu0 0.0
    %v1895 = vand.u32 %v1403, 4294901760
    %v1896 = vsub.f32 %v1403, %v1895
    %v1897 = vand.u32 %v1896, 4294901760
    %1898 = vmatpush1.msra.mxu0 %v1897
    %1899 = vmatprep.subr.mxu0 0.0
    %v1900 = vand.u32 %v1404, 4294901760
    %v1901 = vsub.f32 %v1404, %v1900
    %v1902 = vand.u32 %v1901, 4294901760
    %1903 = vmatpush1.msra.mxu0 %v1902
    %1904 = vmatprep.subr.mxu0 0.0
    %v1905 = vand.u32 %v1405, 4294901760
    %v1906 = vsub.f32 %v1405, %v1905
    %v1907 = vand.u32 %v1906, 4294901760
    %1908 = vmatpush1.msra.mxu0 %v1907
    %1909 = vmatprep.subr.mxu0 0.0
    %v1910 = vand.u32 %v1406, 4294901760
    %v1911 = vsub.f32 %v1406, %v1910
    %v1912 = vand.u32 %v1911, 4294901760
    %1913 = vmatpush1.msra.mxu0 %v1912
    %1914 = vmatprep.subr.mxu0 0.0
    %v1915 = vand.u32 %v1407, 4294901760
    %v1916 = vsub.f32 %v1407, %v1915
    %v1917 = vand.u32 %v1916, 4294901760
    %1918 = vmatpush1.msra.mxu0 %v1917
    %1919 = vmatprep.subr.mxu0 0.0
    %v1920 = vand.u32 %v1408, 4294901760
    %v1921 = vsub.f32 %v1408, %v1920
    %v1922 = vand.u32 %v1921, 4294901760
    %1923 = vmatpush1.msra.mxu0 %v1922
    %1924 = vmatprep.subr.mxu0 0.0
    %1925 = vmatpush1.msra.mxu0 0.0
    %1926 = vmatprep.subr.mxu0 0.0
    %1927 = vmatpush1.msra.mxu0 0.0
    %1928 = vmatprep.subr.mxu0 0.0
    %1929 = vmatpush1.msra.mxu0 0.0
    %1930 = vmatprep.subr.mxu0 0.0
    %1931 = vmatpush1.msra.mxu0 0.0
    %1932 = vmatprep.subr.mxu0 0.0
    %1933 = vmatpush1.msra.mxu0 0.0
    %1934 = vmatprep.subr.mxu0 0.0
    %1935 = vmatpush1.msra.mxu0 0.0
    %1936 = vmatprep.subr.mxu0 0.0
    %1937 = vmatpush1.msra.mxu0 0.0
    %1938 = vmatprep.subr.mxu0 0.0
    %1939 = vmatpush1.msra.mxu0 0.0
    %1940 = vmatprep.subr.mxu0 0.0
    %1941 = vmatpush1.msra.mxu0 0.0
    %1942 = vmatprep.subr.mxu0 0.0
    %1943 = vmatpush1.msra.mxu0 0.0
    %1944 = vmatprep.subr.mxu0 0.0
    %1945 = vmatpush1.msra.mxu0 0.0
    %1946 = vmatprep.subr.mxu0 0.0
    %1947 = vmatpush1.msra.mxu0 0.0
    %1948 = vmatprep.subr.mxu0 0.0
    %1949 = vmatpush1.msra.mxu0 0.0
    %1950 = vmatprep.subr.mxu0 0.0
    %1951 = vmatpush1.msra.mxu0 0.0
    %1952 = vmatprep.subr.mxu0 0.0
    %1953 = vmatpush1.msra.mxu0 0.0
    %1954 = vmatprep.subr.mxu0 0.0
    %1955 = vmatpush1.msra.mxu0 0.0
    %1956 = vmatprep.mubr.f32.mxu0 0.0
    %v1957 = vand.u32 %v1392, 4294901760
    %1958 = vmatmul.mubr.f32.gmra.mrb[0].mxu0 %v1957
    %v1959 = vpop.f32.mrb[0].mxu0
    %v1960 = vadd.f32 %v1841, %v1959
    %v1961 = vpop.f32.mrb[0].mxu0
    %1962 = vdwg.mxu0
    %1963 = vmatprep.subr.mxu0 0.0
    %v1964 = vand.u32 %v1393, 4294901760
    %1965 = vmatpush1.msra.mxu0 %v1964
    %1966 = vmatprep.subr.mxu0 0.0
    %v1967 = vand.u32 %v1394, 4294901760
    %1968 = vmatpush1.msra.mxu0 %v1967
    %1969 = vmatprep.subr.mxu0 0.0
    %v1970 = vand.u32 %v1395, 4294901760
    %1971 = vmatpush1.msra.mxu0 %v1970
    %1972 = vmatprep.subr.mxu0 0.0
    %v1973 = vand.u32 %v1396, 4294901760
    %1974 = vmatpush1.msra.mxu0 %v1973
    %1975 = vmatprep.subr.mxu0 0.0
    %v1976 = vand.u32 %v1397, 4294901760
    %1977 = vmatpush1.msra.mxu0 %v1976
    %1978 = vmatprep.subr.mxu0 0.0
    %v1979 = vand.u32 %v1398, 4294901760
    %1980 = vmatpush1.msra.mxu0 %v1979
    %1981 = vmatprep.subr.mxu0 0.0
    %v1982 = vand.u32 %v1399, 4294901760
    %1983 = vmatpush1.msra.mxu0 %v1982
    %1984 = vmatprep.subr.mxu0 0.0
    %v1985 = vand.u32 %v1400, 4294901760
    %1986 = vmatpush1.msra.mxu0 %v1985
    %1987 = vmatprep.subr.mxu0 0.0
    %v1988 = vand.u32 %v1401, 4294901760
    %1989 = vmatpush1.msra.mxu0 %v1988
    %1990 = vmatprep.subr.mxu0 0.0
    %v1991 = vand.u32 %v1402, 4294901760
    %1992 = vmatpush1.msra.mxu0 %v1991
    %1993 = vmatprep.subr.mxu0 0.0
    %v1994 = vand.u32 %v1403, 4294901760
    %1995 = vmatpush1.msra.mxu0 %v1994
    %1996 = vmatprep.subr.mxu0 0.0
    %v1997 = vand.u32 %v1404, 4294901760
    %1998 = vmatpush1.msra.mxu0 %v1997
    %1999 = vmatprep.subr.mxu0 0.0
    %v2000 = vand.u32 %v1405, 4294901760
    %2001 = vmatpush1.msra.mxu0 %v2000
    %2002 = vmatprep.subr.mxu0 0.0
    %v2003 = vand.u32 %v1406, 4294901760
    %2004 = vmatpush1.msra.mxu0 %v2003
    %2005 = vmatprep.subr.mxu0 0.0
    %v2006 = vand.u32 %v1407, 4294901760
    %2007 = vmatpush1.msra.mxu0 %v2006
    %2008 = vmatprep.subr.mxu0 0.0
    %v2009 = vand.u32 %v1408, 4294901760
    %2010 = vmatpush1.msra.mxu0 %v2009
    %2011 = vmatprep.subr.mxu0 0.0
    %2012 = vmatpush1.msra.mxu0 0.0
    %2013 = vmatprep.subr.mxu0 0.0
    %2014 = vmatpush1.msra.mxu0 0.0
    %2015 = vmatprep.subr.mxu0 0.0
    %2016 = vmatpush1.msra.mxu0 0.0
    %2017 = vmatprep.subr.mxu0 0.0
    %2018 = vmatpush1.msra.mxu0 0.0
    %2019 = vmatprep.subr.mxu0 0.0
    %2020 = vmatpush1.msra.mxu0 0.0
    %2021 = vmatprep.subr.mxu0 0.0
    %2022 = vmatpush1.msra.mxu0 0.0
    %2023 = vmatprep.subr.mxu0 0.0
    %2024 = vmatpush1.msra.mxu0 0.0
    %2025 = vmatprep.subr.mxu0 0.0
    %2026 = vmatpush1.msra.mxu0 0.0
    %2027 = vmatprep.subr.mxu0 0.0
    %2028 = vmatpush1.msra.mxu0 0.0
    %2029 = vmatprep.subr.mxu0 0.0
    %2030 = vmatpush1.msra.mxu0 0.0
    %2031 = vmatprep.subr.mxu0 0.0
    %2032 = vmatpush1.msra.mxu0 0.0
    %2033 = vmatprep.subr.mxu0 0.0
    %2034 = vmatpush1.msra.mxu0 0.0
    %2035 = vmatprep.subr.mxu0 0.0
    %2036 = vmatpush1.msra.mxu0 0.0
    %2037 = vmatprep.subr.mxu0 0.0
    %2038 = vmatpush1.msra.mxu0 0.0
    %2039 = vmatprep.subr.mxu0 0.0
    %2040 = vmatpush1.msra.mxu0 0.0
    %2041 = vmatprep.subr.mxu0 0.0
    %2042 = vmatpush1.msra.mxu0 0.0
    %2043 = vmatprep.mubr.f32.mxu0 0.0
    %v2044 = vand.u32 %v1392, 4294901760
    %2045 = vmatmul.mubr.f32.gmra.mrb[0].mxu0 %v2044
    %v2046 = vpop.f32.mrb[0].mxu0
    %v2047 = vadd.f32 %v1960, %v2046
    %v2048 = vpop.f32.mrb[0].mxu0
    %2049 = vdwg.mxu0
    %v2050 = vtanh.pop %v2047
    %v2051 = vstv %s75
    %v2052 = vmul.f32 %v2050, %v2051
    %2053 = vst [vmem:[#allocation11] sm:$0xff] %v2052
    // Predicated region
    $region38: #{tpu_custom_call.1} parent=1 // pred_check
      _
    $region39: #{tpu_custom_call.1} parent=1 // pred_check_branch
      %2055 = sbr.rel (0) target = $region41
    $region40: #{tpu_custom_call.1} parent=1 // pred_region
      %s2057 = ssub.s32 128, 128
      %2058 = vsyncadd [#allocation5], %s2057
      %s2060 = sshll.u32 [#allocation11], 4
      %s2061 = int_to_ptr.vmem [resolvable:$true] %s2060
      %2063 = dma.vmem_to_hbm [thread:$0]  %s2061, 128, %s5, [#allocation5]
    $region41: #{tpu_custom_call.1} parent=1 // pred_fallthru
      _
    // Predicated region
    $region42: #{tpu_custom_call.1} parent=1 // pred_check
      _
    $region43: #{tpu_custom_call.1} parent=1 // pred_check_branch
      %2065 = sbr.rel (0) target = $region45
    $region44: #{tpu_custom_call.1} parent=1 // pred_region
      %2066 = dma.done [#allocation5], 128
    $region45: #{tpu_custom_call.1} parent=1 // pred_fallthru
      _
    %2067 = vsyncpa [#allocation4], 1
    %2068 = vsyncpa [#allocation7], 1
    %2069 = vsyncpa [#allocation10], 1
    %2070 = vsyncpa [#allocation5], 1

</llo_original>
